<compile_context>
chip_gen: v7x
topology: tpu7x:2x2x1
jax: 0.10.0
libtpu: 0.0.40
codegen_flags: <defaults>
</compile_context>

<pallas_src>
import functools

import numpy as np

import jax
import jax.numpy as jnp
from jax import lax
from jax.experimental import pallas as pl
from jax.experimental.pallas import tpu as pltpu


# --------------------------------------------------------------------------- #
# wrapper-side weight / layout preparation (pure layout plumbing)
# --------------------------------------------------------------------------- #
def _stacked_banded_weight(w, Wdim, R):
    """(Cout, Cin, K, K) conv weight -> (S*R*W*Cin, R*W*Cout) stacked banded matrix.

    Row index   = ((s*R + i)*W + j_in)*Cin + ci     (s = super-row tap)
    Col index   = (i_out*W + j_out)*Cout + co
    Entry       = w[co, ci, kh, kw]  with  kh = R*(s - n_half) + i - i_out + p
                                           kw = j_in - j_out + p
    (zero outside the valid band), which folds the kh taps, the kw taps and the
    'same' W-padding into one matmul contraction per conv.
    """
    Co, Ci, K, _ = w.shape
    p = K // 2
    n_half = -(-p // R)                      # halo in super-rows
    S = 2 * n_half + 1
    s_ = np.arange(S)[:, None, None, None]
    i_ = np.arange(R)[None, :, None, None]
    o_ = np.arange(R)[None, None, :, None]
    kh = np.arange(K)[None, None, None, :]
    ind_h = (R * (s_ - n_half) + i_ - o_ + p == kh).astype(np.float32)   # (S,R,R,K)
    ji = np.arange(Wdim)[:, None, None]
    jo = np.arange(Wdim)[None, :, None]
    kw = np.arange(K)[None, None, :]
    ind_w = (ji - jo + p == kw).astype(np.float32)                       # (W,W,K)
    wk = jnp.transpose(w, (2, 3, 1, 0)).astype(jnp.float32)              # (Kh,Kw,Ci,Co)
    big = jnp.einsum('sioh,abw,hwcd->siacobd',
                     jnp.asarray(ind_h), jnp.asarray(ind_w), wk)
    return big.reshape(S * R * Wdim * Ci, R * Wdim * Co)


def _pool_tile(L, C):
    """Indicator matrices mapping fused lanes (.. * C + c) <-> channels c."""
    lane_c = np.arange(L) % C
    pool = (lane_c[:, None] == np.arange(C)[None, :]).astype(np.float32)  # (L, C)
    tile = np.ascontiguousarray(pool.T)                                   # (C, L)
    return jnp.asarray(pool), jnp.asarray(tile)


# --------------------------------------------------------------------------- #
# in-kernel BatchNorm: single-pass batch stats, folded affine
# --------------------------------------------------------------------------- #
def _bn_apply(acc, pool, tile, gamma, beta, n_red, eps, relu):
    inv_n = 1.0 / n_red
    col_sum = jnp.sum(acc, axis=0, keepdims=True)                 # (1, L)
    col_sq = jnp.sum(acc * acc, axis=0, keepdims=True)            # (1, L)
    mean_c = jnp.dot(col_sum, pool, preferred_element_type=jnp.float32) * inv_n
    ex2_c = jnp.dot(col_sq, pool, preferred_element_type=jnp.float32) * inv_n
    var_c = ex2_c - mean_c * mean_c                               # E[x^2]-mean^2, f32
    scale_c = gamma * lax.rsqrt(var_c + eps)                      # (1, C)
    shift_c = beta - mean_c * scale_c                             # (1, C)
    scale_l = jnp.dot(scale_c, tile, preferred_element_type=jnp.float32)
    shift_l = jnp.dot(shift_c, tile, preferred_element_type=jnp.float32)
    out = acc * scale_l + shift_l                                 # one mul + one add
    if relu:
        out = jnp.maximum(out, 0.0)
    return out


# --------------------------------------------------------------------------- #
# fused kernel
# --------------------------------------------------------------------------- #
def _resblock_kernel(*refs, N, Hs, R, W, S, n_half, top, Cin, Cmid, Cout,
                     identity_res, eps, out_rows, out_cols):
    if identity_res:
        (xpad_ref, w1_ref, pool1_ref, tile1_ref, g1_ref, be1_ref,
         w2_ref, pool2_ref, tile2_ref, g2_ref, be2_ref,
         out_ref, hpad_ref, p1_ref, p2_ref) = refs
        wres_ref = bres_ref = None
    else:
        (xpad_ref, w1_ref, pool1_ref, tile1_ref, g1_ref, be1_ref,
         w2_ref, pool2_ref, tile2_ref, g2_ref, be2_ref, wres_ref, bres_ref,
         out_ref, hpad_ref, p1_ref, p2_ref) = refs

    NHs = N * Hs
    Lin, Lmid, Lout = R * W * Cin, R * W * Cmid, R * W * Cout
    n_red = float(N * Hs * R * W)            # == N*H*W elements per channel

    # ---- conv1: im2col patch (S shifted super-row views at static lane
    #      offsets) -> ONE MXU matmul, contraction S*Lin, f32 accumulate. ------
    for s in range(S):
        p1_ref[:, s * Lin:(s + 1) * Lin] = (
            xpad_ref[:, s:s + Hs, :].reshape(NHs, Lin))
    acc1 = jnp.dot(p1_ref[...], w1_ref[...],
                   preferred_element_type=jnp.float32)            # (NHs, Lmid)

    # ---- BN1 (batch stats, folded) + ReLU ------------------------------------
    h = _bn_apply(acc1, pool1_ref[...], tile1_ref[...],
                  g1_ref[...], be1_ref[...], n_red, eps, relu=True)

    # ---- stage to bf16 H-padded scratch; interior at sublane-aligned `top`,
    #      only the halo super-rows are zeroed. --------------------------------
    if n_half > 0:
        zero = jnp.zeros((N, n_half, Lmid), jnp.bfloat16)
        hpad_ref[:, top - n_half:top, :] = zero
        hpad_ref[:, top + Hs:top + Hs + n_half, :] = zero
    hpad_ref[:, top:top + Hs, :] = h.astype(jnp.bfloat16).reshape(N, Hs, Lmid)

    # ---- conv2: same single-matmul im2col structure ---------------------------
    base = top - n_half
    for s in range(S):
        p2_ref[:, s * Lmid:(s + 1) * Lmid] = (
            hpad_ref[:, base + s:base + s + Hs, :].reshape(NHs, Lmid))
    acc2 = jnp.dot(p2_ref[...], w2_ref[...],
                   preferred_element_type=jnp.float32)            # (NHs, Lout)

    # ---- BN2 ------------------------------------------------------------------
    y = _bn_apply(acc2, pool2_ref[...], tile2_ref[...],
                  g2_ref[...], be2_ref[...], n_red, eps, relu=False)

    # ---- residual path --------------------------------------------------------
    x_int = xpad_ref[:, n_half:n_half + Hs, :].reshape(NHs, Lin)
    if identity_res:
        res = x_int.astype(jnp.float32)       # Cin == Cout -> identical layout
    else:
        res = jnp.dot(x_int, wres_ref[...],
                      preferred_element_type=jnp.float32) + bres_ref[...]

    # ---- lane-dense output store ----------------------------------------------
    out_ref[...] = (res + y).reshape(out_rows, out_cols)


# --------------------------------------------------------------------------- #
# wrapper
# --------------------------------------------------------------------------- #
def residual_block_2d(x_nchw, w1, b1, g1, be1, w2, b2, g2, be2,
                      wres=None, bres=None, *, kernel_size, eps=1e-5):
    """Forward pass of ResidualBlock2d (PyTorch conventions: NCHW / OIHW).

    b1/b2 are accepted for signature parity; they are mathematically absorbed
    by the training-mode BatchNorm that immediately follows each conv.
    """
    del b1, b2
    N, Cin, H, W = x_nchw.shape
    K = kernel_size
    p = K // 2
    Cmid = w1.shape[0]
    Cout = w2.shape[0]
    identity_res = wres is None
    if identity_res and Cin != Cout:
        raise ValueError("identity residual requires in_channels == out_channels")

    # row-packing factor R: pack R rows of H onto the lane axis so the
    # narrowest lane-fused activation reaches >= 128 lanes.
    cmin = min(Cin, Cmid, Cout)
    R = 1
    while R < 8 and H % (2 * R) == 0 and R * W * cmin < 128:
        R *= 2
    Hs = H // R
    n_half = -(-p // R)                       # halo in super-rows
    S = 2 * n_half + 1
    top = ((n_half + 7) // 8) * 8 if n_half > 0 else 0   # aligned interior offset
    Lin, Lmid, Lout = R * W * Cin, R * W * Cmid, R * W * Cout

    # NCHW -> packed lane-fused (N, Hs, R*W*Cin) bf16, padded along super-rows.
    x_f = jnp.transpose(x_nchw, (0, 2, 3, 1)).astype(jnp.float32).reshape(N, Hs, Lin)
    x_pad = jnp.pad(x_f, ((0, 0), (n_half, n_half), (0, 0))).astype(jnp.bfloat16)

    w1_stk = _stacked_banded_weight(w1, W, R).astype(jnp.bfloat16)   # (S*Lin,  Lmid)
    w2_stk = _stacked_banded_weight(w2, W, R).astype(jnp.bfloat16)   # (S*Lmid, Lout)
    pool1, tile1 = _pool_tile(Lmid, Cmid)
    pool2, tile2 = _pool_tile(Lout, Cout)

    args = [x_pad, w1_stk, pool1, tile1,
            g1.reshape(1, Cmid).astype(jnp.float32),
            be1.reshape(1, Cmid).astype(jnp.float32),
            w2_stk, pool2, tile2,
            g2.reshape(1, Cout).astype(jnp.float32),
            be2.reshape(1, Cout).astype(jnp.float32)]
    if not identity_res:
        wres_stk = _stacked_banded_weight(wres, W, R).astype(jnp.bfloat16)  # (Lin,Lout)
        bres_l = jnp.tile(bres.astype(jnp.float32), R * W).reshape(1, Lout)
        args += [wres_stk, bres_l]

    total = N * Hs * Lout
    if Lout % 128 == 0:
        out_rows, out_cols = N * Hs, Lout          # already lane-dense, no repack
    elif total % 128 == 0:
        out_rows, out_cols = total // 128, 128     # repack for unmasked 128-lane vst
    else:
        out_rows, out_cols = N * Hs, Lout

    kernel = functools.partial(
        _resblock_kernel,
        N=N, Hs=Hs, R=R, W=W, S=S, n_half=n_half, top=top,
        Cin=Cin, Cmid=Cmid, Cout=Cout, identity_res=identity_res, eps=eps,
        out_rows=out_rows, out_cols=out_cols)

    scratch = [
        pltpu.VMEM((N, top + Hs + n_half, Lmid), jnp.bfloat16),  # H-padded h (bf16)
        pltpu.VMEM((N * Hs, S * Lin), jnp.bfloat16),             # im2col patch, conv1
        pltpu.VMEM((N * Hs, S * Lmid), jnp.bfloat16),            # im2col patch, conv2
    ]

    # explicit scoped-VMEM budget (defaults are 16/32 MiB vs 128/128/64 physical)
    arg_bytes = sum(int(np.prod(a.shape)) * a.dtype.itemsize for a in args)
    scr_bytes = 2 * (N * (top + Hs + n_half) * Lmid + N * Hs * S * (Lin + Lmid))
    out_bytes = out_rows * out_cols * 4
    vmem_budget = int(min(64 * 1024 * 1024,
                          max(8 * 1024 * 1024,
                              2 * (arg_bytes + scr_bytes + out_bytes))))

    vmem_spec = pl.BlockSpec(memory_space=pltpu.MemorySpace.VMEM)
    out_flat = pl.pallas_call(
        kernel,
        out_shape=jax.ShapeDtypeStruct((out_rows, out_cols), jnp.float32),
        in_specs=[vmem_spec] * len(args),
        out_specs=vmem_spec,
        scratch_shapes=scratch,
        compiler_params=pltpu.CompilerParams(vmem_limit_bytes=vmem_budget),
    )(*args)

    out_nhwc = out_flat.reshape(N, Hs, R, W, Cout).reshape(N, H, W, Cout)
    return jnp.transpose(out_nhwc, (0, 3, 1, 2))


# --------------------------------------------------------------------------- #
# pure-JAX reference (f32 everywhere)
# --------------------------------------------------------------------------- #
def _ref_forward(x, w1, b1, g1, be1, w2, b2, g2, be2, wres, bres, eps=1e-5):
    def conv(x, w, b):
        y = lax.conv_general_dilated(x, w, (1, 1), 'SAME',
                                     dimension_numbers=('NCHW', 'OIHW', 'NCHW'))
        return y + b[None, :, None, None]

    def bn(x, g, be):
        mean = jnp.mean(x, axis=(0, 2, 3), keepdims=True)
        var = jnp.mean((x - mean) ** 2, axis=(0, 2, 3), keepdims=True)
        return ((x - mean) * lax.rsqrt(var + eps)
                * g[None, :, None, None] + be[None, :, None, None])

    h = jnp.maximum(bn(conv(x, w1, b1), g1, be1), 0.0)
    y = bn(conv(h, w2, b2), g2, be2)
    res = x if wres is None else conv(x, wres, bres)
    return res + y


if __name__ == "__main__":
    N, H, W, K = 2, 16, 16, 3
    key = jax.random.PRNGKey(0)
    k = jax.random.split(key, 12)

    # --- case 1: in_channels == out_channels -> residual is Identity ----------
    Cin, Cout, Cmid = 4, 4, 8
    x = jax.random.normal(k[0], (N, Cin, H, W), jnp.float32)
    w1 = jax.random.normal(k[1], (Cmid, Cin, K, K), jnp.float32) * 0.1
    b1 = jax.random.normal(k[2], (Cmid,), jnp.float32) * 0.1
    w2 = jax.random.normal(k[3], (Cout, Cmid, K, K), jnp.float32) * 0.1
    b2 = jax.random.normal(k[4], (Cout,), jnp.float32) * 0.1
    g1, be1 = jnp.ones((Cmid,), jnp.float32), jnp.zeros((Cmid,), jnp.float32)
    g2, be2 = jnp.ones((Cout,), jnp.float32), jnp.zeros((Cout,), jnp.float32)

    out = residual_block_2d(x, w1, b1, g1, be1, w2, b2, g2, be2,
                            None, None, kernel_size=K)
    out = jax.block_until_ready(out)
    ref = _ref_forward(x, w1, b1, g1, be1, w2, b2, g2, be2, None, None)
    assert out.shape == (N, Cout, H, W)
    err = float(jnp.max(jnp.abs(out - ref)))
    # bf16 activations + bf16 MXU operands (f32 accumulation) -> loose tolerance.
    assert err < 6e-2, err

    # --- case 2: in_channels != out_channels -> residual is a 1x1 conv --------
    Cin2, Cout2 = 4, 6
    Cmid2 = Cout2
    x2 = jax.random.normal(k[5], (N, Cin2, H, W), jnp.float32)
    w1b = jax.random.normal(k[6], (Cmid2, Cin2, K, K), jnp.float32) * 0.1
    b1b = jax.random.normal(k[7], (Cmid2,), jnp.float32) * 0.1
    w2b = jax.random.normal(k[8], (Cout2, Cmid2, K, K), jnp.float32) * 0.1
    b2b = jax.random.normal(k[9], (Cout2,), jnp.float32) * 0.1
    wres = jax.random.normal(k[10], (Cout2, Cin2, 1, 1), jnp.float32) * 0.1
    bres = jax.random.normal(k[11], (Cout2,), jnp.float32) * 0.1
    g1b, be1b = jnp.ones((Cmid2,), jnp.float32), jnp.zeros((Cmid2,), jnp.float32)
    g2b, be2b = jnp.ones((Cout2,), jnp.float32), jnp.zeros((Cout2,), jnp.float32)

    out2 = residual_block_2d(x2, w1b, b1b, g1b, be1b, w2b, b2b, g2b, be2b,
                             wres, bres, kernel_size=K)
    out2 = jax.block_until_ready(out2)
    ref2 = _ref_forward(x2, w1b, b1b, g1b, be1b, w2b, b2b, g2b, be2b, wres, bres)
    assert out2.shape == (N, Cout2, H, W)
    err2 = float(jnp.max(jnp.abs(out2 - ref2)))
    assert err2 < 6e-2, err2

    print("KERNEL_OK")
</pallas_src>

<mosaic_0001>
module attributes {stable_mosaic.version = 11 : i64} {
  func.func @_resblock_kernel(%arg0: memref<2x10x128xbf16, #tpu.memory_space<vmem>>, %arg1: memref<384x256xbf16, #tpu.memory_space<vmem>>, %arg2: memref<256x8xf32, #tpu.memory_space<vmem>>, %arg3: memref<8x256xf32, #tpu.memory_space<vmem>>, %arg4: memref<1x8xf32, #tpu.memory_space<vmem>>, %arg5: memref<1x8xf32, #tpu.memory_space<vmem>>, %arg6: memref<768x128xbf16, #tpu.memory_space<vmem>>, %arg7: memref<128x4xf32, #tpu.memory_space<vmem>>, %arg8: memref<4x128xf32, #tpu.memory_space<vmem>>, %arg9: memref<1x4xf32, #tpu.memory_space<vmem>>, %arg10: memref<1x4xf32, #tpu.memory_space<vmem>>, %arg11: memref<16x128xf32, #tpu.memory_space<vmem>>, %arg12: memref<2x17x256xbf16, #tpu.memory_space<vmem>>, %arg13: memref<16x384xbf16, #tpu.memory_space<vmem>>, %arg14: memref<16x768xbf16, #tpu.memory_space<vmem>>) attributes {dimension_semantics = [], scalar_prefetch = 0 : i64, scratch_operands = 3 : i64, tpu.core_type = #tpu.core_type<tc>} {
    %c0 = arith.constant 0 : index
    %c0_0 = arith.constant 0 : index
    %c0_1 = arith.constant 0 : index
    %0 = vector.load %arg0[%c0, %c0_0, %c0_1] : memref<2x10x128xbf16, #tpu.memory_space<vmem>>, vector<2x8x128xbf16>
    %1 = vector.shape_cast %0 : vector<2x8x128xbf16> to vector<16x128xbf16>
    %c0_2 = arith.constant 0 : index
    %c0_3 = arith.constant 0 : index
    %2 = vector.load %arg13[%c0_2, %c0_3] : memref<16x384xbf16, #tpu.memory_space<vmem>>, vector<16x128xbf16>
    tpu.vector_store %arg13[%c0_2, %c0_3], %1 {strides = array<i32>} : memref<16x384xbf16, #tpu.memory_space<vmem>>, vector<16x128xbf16>,
    %c0_4 = arith.constant 0 : index
    %c1 = arith.constant 1 : index
    %c0_5 = arith.constant 0 : index
    %3 = vector.load %arg0[%c0_4, %c1, %c0_5] : memref<2x10x128xbf16, #tpu.memory_space<vmem>>, vector<2x8x128xbf16>
    %4 = vector.shape_cast %3 : vector<2x8x128xbf16> to vector<16x128xbf16>
    %c0_6 = arith.constant 0 : index
    %c128 = arith.constant 128 : index
    %5 = vector.load %arg13[%c0_6, %c128] : memref<16x384xbf16, #tpu.memory_space<vmem>>, vector<16x128xbf16>
    tpu.vector_store %arg13[%c0_6, %c128], %4 {strides = array<i32>} : memref<16x384xbf16, #tpu.memory_space<vmem>>, vector<16x128xbf16>,
    %c0_7 = arith.constant 0 : index
    %c2 = arith.constant 2 : index
    %c0_8 = arith.constant 0 : index
    %6 = vector.load %arg0[%c0_7, %c2, %c0_8] : memref<2x10x128xbf16, #tpu.memory_space<vmem>>, vector<2x8x128xbf16>
    %7 = vector.shape_cast %6 : vector<2x8x128xbf16> to vector<16x128xbf16>
    %c0_9 = arith.constant 0 : index
    %c256 = arith.constant 256 : index
    %8 = vector.load %arg13[%c0_9, %c256] : memref<16x384xbf16, #tpu.memory_space<vmem>>, vector<16x128xbf16>
    tpu.vector_store %arg13[%c0_9, %c256], %7 {strides = array<i32>} : memref<16x384xbf16, #tpu.memory_space<vmem>>, vector<16x128xbf16>,
    %c0_10 = arith.constant 0 : index
    %c0_11 = arith.constant 0 : index
    %9 = vector.load %arg13[%c0_10, %c0_11] : memref<16x384xbf16, #tpu.memory_space<vmem>>, vector<16x384xbf16>
    %c0_12 = arith.constant 0 : index
    %c0_13 = arith.constant 0 : index
    %10 = vector.load %arg1[%c0_12, %c0_13] : memref<384x256xbf16, #tpu.memory_space<vmem>>, vector<384x256xbf16>
    %cst = arith.constant dense<0.000000e+00> : vector<16x256xf32>
    %11 = tpu.matmul %9, %10, %cst {dimension_numbers = #tpu.dot_dimension_numbers<[1], [0], [0], [1], [0, 0, 1, 1], [], []>} : vector<16x384xbf16>, vector<384x256xbf16>, vector<16x256xf32> -> vector<16x256xf32>
    %c0_14 = arith.constant 0 : index
    %c0_15 = arith.constant 0 : index
    %12 = vector.load %arg2[%c0_14, %c0_15] : memref<256x8xf32, #tpu.memory_space<vmem>>, vector<256x8xf32>
    %c0_16 = arith.constant 0 : index
    %c0_17 = arith.constant 0 : index
    %13 = vector.load %arg3[%c0_16, %c0_17] : memref<8x256xf32, #tpu.memory_space<vmem>>, vector<8x256xf32>
    %c0_18 = arith.constant 0 : index
    %c0_19 = arith.constant 0 : index
    %14 = vector.load %arg4[%c0_18, %c0_19] : memref<1x8xf32, #tpu.memory_space<vmem>>, vector<1x8xf32>
    %c0_20 = arith.constant 0 : index
    %c0_21 = arith.constant 0 : index
    %15 = vector.load %arg5[%c0_20, %c0_21] : memref<1x8xf32, #tpu.memory_space<vmem>>, vector<1x8xf32>
    %cst_22 = arith.constant dense<0.000000e+00> : vector<256xf32>
    %16 = vector.multi_reduction <add>, %11, %cst_22 [0] : vector<16x256xf32> to vector<256xf32>
    %17 = vector.shape_cast %16 : vector<256xf32> to vector<1x256xf32>
    %18 = arith.mulf %11, %11 : vector<16x256xf32>
    %cst_23 = arith.constant dense<0.000000e+00> : vector<256xf32>
    %19 = vector.multi_reduction <add>, %18, %cst_23 [0] : vector<16x256xf32> to vector<256xf32>
    %20 = vector.shape_cast %19 : vector<256xf32> to vector<1x256xf32>
    %cst_24 = arith.constant dense<0.000000e+00> : vector<1x8xf32>
    %21 = tpu.matmul %17, %12, %cst_24 {dimension_numbers = #tpu.dot_dimension_numbers<[1], [0], [0], [1], [0, 0, 1, 1], [], []>} : vector<1x256xf32>, vector<256x8xf32>, vector<1x8xf32> -> vector<1x8xf32>
    %cst_25 = arith.constant 0.001953125 : f32
    %22 = vector.broadcast %cst_25 : f32 to vector<1x8xf32>
    %23 = arith.mulf %21, %22 : vector<1x8xf32>
    %cst_26 = arith.constant dense<0.000000e+00> : vector<1x8xf32>
    %24 = tpu.matmul %20, %12, %cst_26 {dimension_numbers = #tpu.dot_dimension_numbers<[1], [0], [0], [1], [0, 0, 1, 1], [], []>} : vector<1x256xf32>, vector<256x8xf32>, vector<1x8xf32> -> vector<1x8xf32>
    %cst_27 = arith.constant 0.001953125 : f32
    %25 = vector.broadcast %cst_27 : f32 to vector<1x8xf32>
    %26 = arith.mulf %24, %25 : vector<1x8xf32>
    %27 = arith.mulf %23, %23 : vector<1x8xf32>
    %28 = arith.subf %26, %27 : vector<1x8xf32>
    %cst_28 = arith.constant 9.99999974E-6 : f32
    %29 = vector.broadcast %cst_28 : f32 to vector<1x8xf32>
    %30 = arith.addf %28, %29 : vector<1x8xf32>
    %31 = math.rsqrt %30 : vector<1x8xf32>
    %32 = arith.mulf %14, %31 : vector<1x8xf32>
    %33 = arith.mulf %23, %32 : vector<1x8xf32>
    %34 = arith.subf %15, %33 : vector<1x8xf32>
    %cst_29 = arith.constant dense<0.000000e+00> : vector<1x256xf32>
    %35 = tpu.matmul %32, %13, %cst_29 {dimension_numbers = #tpu.dot_dimension_numbers<[1], [0], [0], [1], [0, 0, 1, 1], [], []>} : vector<1x8xf32>, vector<8x256xf32>, vector<1x256xf32> -> vector<1x256xf32>
    %cst_30 = arith.constant dense<0.000000e+00> : vector<1x256xf32>
    %36 = tpu.matmul %34, %13, %cst_30 {dimension_numbers = #tpu.dot_dimension_numbers<[1], [0], [0], [1], [0, 0, 1, 1], [], []>} : vector<1x8xf32>, vector<8x256xf32>, vector<1x256xf32> -> vector<1x256xf32>
    %37 = vector.broadcast %35 : vector<1x256xf32> to vector<16x256xf32>
    %38 = arith.mulf %11, %37 : vector<16x256xf32>
    %39 = vector.broadcast %36 : vector<1x256xf32> to vector<16x256xf32>
    %40 = arith.addf %38, %39 : vector<16x256xf32>
    %cst_31 = arith.constant 0.000000e+00 : f32
    %41 = vector.broadcast %cst_31 : f32 to vector<16x256xf32>
    %42 = arith.maximumf %40, %41 : vector<16x256xf32>
    %cst_32 = arith.constant 0.000000e+00 : bf16
    %43 = vector.broadcast %cst_32 : bf16 to vector<2x1x256xbf16>
    %c0_33 = arith.constant 0 : index
    %c7 = arith.constant 7 : index
    %c0_34 = arith.constant 0 : index
    %44 = vector.load %arg12[%c0_33, %c7, %c0_34] : memref<2x17x256xbf16, #tpu.memory_space<vmem>>, vector<2x1x256xbf16>
    tpu.vector_store %arg12[%c0_33, %c7, %c0_34], %43 {strides = array<i32>} : memref<2x17x256xbf16, #tpu.memory_space<vmem>>, vector<2x1x256xbf16>,
    %c0_35 = arith.constant 0 : index
    %c16 = arith.constant 16 : index
    %c0_36 = arith.constant 0 : index
    %45 = vector.load %arg12[%c0_35, %c16, %c0_36] : memref<2x17x256xbf16, #tpu.memory_space<vmem>>, vector<2x1x256xbf16>
    tpu.vector_store %arg12[%c0_35, %c16, %c0_36], %43 {strides = array<i32>} : memref<2x17x256xbf16, #tpu.memory_space<vmem>>, vector<2x1x256xbf16>,
    %46 = arith.truncf %42 : vector<16x256xf32> to vector<16x256xbf16>
    %47 = vector.shape_cast %46 : vector<16x256xbf16> to vector<2x8x256xbf16>
    %c0_37 = arith.constant 0 : index
    %c8 = arith.constant 8 : index
    %c0_38 = arith.constant 0 : index
    %48 = vector.load %arg12[%c0_37, %c8, %c0_38] : memref<2x17x256xbf16, #tpu.memory_space<vmem>>, vector<2x8x256xbf16>
    tpu.vector_store %arg12[%c0_37, %c8, %c0_38], %47 {strides = array<i32>} : memref<2x17x256xbf16, #tpu.memory_space<vmem>>, vector<2x8x256xbf16>,
    %c0_39 = arith.constant 0 : index
    %c7_40 = arith.constant 7 : index
    %c0_41 = arith.constant 0 : index
    %49 = vector.load %arg12[%c0_39, %c7_40, %c0_41] : memref<2x17x256xbf16, #tpu.memory_space<vmem>>, vector<2x8x256xbf16>
    %50 = vector.shape_cast %49 : vector<2x8x256xbf16> to vector<16x256xbf16>
    %c0_42 = arith.constant 0 : index
    %c0_43 = arith.constant 0 : index
    %51 = vector.load %arg14[%c0_42, %c0_43] : memref<16x768xbf16, #tpu.memory_space<vmem>>, vector<16x256xbf16>
    tpu.vector_store %arg14[%c0_42, %c0_43], %50 {strides = array<i32>} : memref<16x768xbf16, #tpu.memory_space<vmem>>, vector<16x256xbf16>,
    %c0_44 = arith.constant 0 : index
    %c8_45 = arith.constant 8 : index
    %c0_46 = arith.constant 0 : index
    %52 = vector.load %arg12[%c0_44, %c8_45, %c0_46] : memref<2x17x256xbf16, #tpu.memory_space<vmem>>, vector<2x8x256xbf16>
    %53 = vector.shape_cast %52 : vector<2x8x256xbf16> to vector<16x256xbf16>
    %c0_47 = arith.constant 0 : index
    %c256_48 = arith.constant 256 : index
    %54 = vector.load %arg14[%c0_47, %c256_48] : memref<16x768xbf16, #tpu.memory_space<vmem>>, vector<16x256xbf16>
    tpu.vector_store %arg14[%c0_47, %c256_48], %53 {strides = array<i32>} : memref<16x768xbf16, #tpu.memory_space<vmem>>, vector<16x256xbf16>,
    %c0_49 = arith.constant 0 : index
    %c9 = arith.constant 9 : index
    %c0_50 = arith.constant 0 : index
    %55 = vector.load %arg12[%c0_49, %c9, %c0_50] : memref<2x17x256xbf16, #tpu.memory_space<vmem>>, vector<2x8x256xbf16>
    %56 = vector.shape_cast %55 : vector<2x8x256xbf16> to vector<16x256xbf16>
    %c0_51 = arith.constant 0 : index
    %c512 = arith.constant 512 : index
    %57 = vector.load %arg14[%c0_51, %c512] : memref<16x768xbf16, #tpu.memory_space<vmem>>, vector<16x256xbf16>
    tpu.vector_store %arg14[%c0_51, %c512], %56 {strides = array<i32>} : memref<16x768xbf16, #tpu.memory_space<vmem>>, vector<16x256xbf16>,
    %c0_52 = arith.constant 0 : index
    %c0_53 = arith.constant 0 : index
    %58 = vector.load %arg14[%c0_52, %c0_53] : memref<16x768xbf16, #tpu.memory_space<vmem>>, vector<16x768xbf16>
    %c0_54 = arith.constant 0 : index
    %c0_55 = arith.constant 0 : index
    %59 = vector.load %arg6[%c0_54, %c0_55] : memref<768x128xbf16, #tpu.memory_space<vmem>>, vector<768x128xbf16>
    %cst_56 = arith.constant dense<0.000000e+00> : vector<16x128xf32>
    %60 = tpu.matmul %58, %59, %cst_56 {dimension_numbers = #tpu.dot_dimension_numbers<[1], [0], [0], [1], [0, 0, 1, 1], [], []>} : vector<16x768xbf16>, vector<768x128xbf16>, vector<16x128xf32> -> vector<16x128xf32>
    %c0_57 = arith.constant 0 : index
    %c0_58 = arith.constant 0 : index
    %61 = vector.load %arg7[%c0_57, %c0_58] : memref<128x4xf32, #tpu.memory_space<vmem>>, vector<128x4xf32>
    %c0_59 = arith.constant 0 : index
    %c0_60 = arith.constant 0 : index
    %62 = vector.load %arg8[%c0_59, %c0_60] : memref<4x128xf32, #tpu.memory_space<vmem>>, vector<4x128xf32>
    %c0_61 = arith.constant 0 : index
    %c0_62 = arith.constant 0 : index
    %63 = vector.load %arg9[%c0_61, %c0_62] : memref<1x4xf32, #tpu.memory_space<vmem>>, vector<1x4xf32>
    %c0_63 = arith.constant 0 : index
    %c0_64 = arith.constant 0 : index
    %64 = vector.load %arg10[%c0_63, %c0_64] : memref<1x4xf32, #tpu.memory_space<vmem>>, vector<1x4xf32>
    %cst_65 = arith.constant dense<0.000000e+00> : vector<128xf32>
    %65 = vector.multi_reduction <add>, %60, %cst_65 [0] : vector<16x128xf32> to vector<128xf32>
    %66 = vector.shape_cast %65 : vector<128xf32> to vector<1x128xf32>
    %67 = arith.mulf %60, %60 : vector<16x128xf32>
    %cst_66 = arith.constant dense<0.000000e+00> : vector<128xf32>
    %68 = vector.multi_reduction <add>, %67, %cst_66 [0] : vector<16x128xf32> to vector<128xf32>
    %69 = vector.shape_cast %68 : vector<128xf32> to vector<1x128xf32>
    %cst_67 = arith.constant dense<0.000000e+00> : vector<1x4xf32>
    %70 = tpu.matmul %66, %61, %cst_67 {dimension_numbers = #tpu.dot_dimension_numbers<[1], [0], [0], [1], [0, 0, 1, 1], [], []>} : vector<1x128xf32>, vector<128x4xf32>, vector<1x4xf32> -> vector<1x4xf32>
    %cst_68 = arith.constant 0.001953125 : f32
    %71 = vector.broadcast %cst_68 : f32 to vector<1x4xf32>
    %72 = arith.mulf %70, %71 : vector<1x4xf32>
    %cst_69 = arith.constant dense<0.000000e+00> : vector<1x4xf32>
    %73 = tpu.matmul %69, %61, %cst_69 {dimension_numbers = #tpu.dot_dimension_numbers<[1], [0], [0], [1], [0, 0, 1, 1], [], []>} : vector<1x128xf32>, vector<128x4xf32>, vector<1x4xf32> -> vector<1x4xf32>
    %cst_70 = arith.constant 0.001953125 : f32
    %74 = vector.broadcast %cst_70 : f32 to vector<1x4xf32>
    %75 = arith.mulf %73, %74 : vector<1x4xf32>
    %76 = arith.mulf %72, %72 : vector<1x4xf32>
    %77 = arith.subf %75, %76 : vector<1x4xf32>
    %cst_71 = arith.constant 9.99999974E-6 : f32
    %78 = vector.broadcast %cst_71 : f32 to vector<1x4xf32>
    %79 = arith.addf %77, %78 : vector<1x4xf32>
    %80 = math.rsqrt %79 : vector<1x4xf32>
    %81 = arith.mulf %63, %80 : vector<1x4xf32>
    %82 = arith.mulf %72, %81 : vector<1x4xf32>
    %83 = arith.subf %64, %82 : vector<1x4xf32>
    %cst_72 = arith.constant dense<0.000000e+00> : vector<1x128xf32>
    %84 = tpu.matmul %81, %62, %cst_72 {dimension_numbers = #tpu.dot_dimension_numbers<[1], [0], [0], [1], [0, 0, 1, 1], [], []>} : vector<1x4xf32>, vector<4x128xf32>, vector<1x128xf32> -> vector<1x128xf32>
    %cst_73 = arith.constant dense<0.000000e+00> : vector<1x128xf32>
    %85 = tpu.matmul %83, %62, %cst_73 {dimension_numbers = #tpu.dot_dimension_numbers<[1], [0], [0], [1], [0, 0, 1, 1], [], []>} : vector<1x4xf32>, vector<4x128xf32>, vector<1x128xf32> -> vector<1x128xf32>
    %86 = vector.broadcast %84 : vector<1x128xf32> to vector<16x128xf32>
    %87 = arith.mulf %60, %86 : vector<16x128xf32>
    %88 = vector.broadcast %85 : vector<1x128xf32> to vector<16x128xf32>
    %89 = arith.addf %87, %88 : vector<16x128xf32>
    %c0_74 = arith.constant 0 : index
    %c1_75 = arith.constant 1 : index
    %c0_76 = arith.constant 0 : index
    %90 = vector.load %arg0[%c0_74, %c1_75, %c0_76] : memref<2x10x128xbf16, #tpu.memory_space<vmem>>, vector<2x8x128xbf16>
    %91 = vector.shape_cast %90 : vector<2x8x128xbf16> to vector<16x128xbf16>
    %92 = arith.extf %91 : vector<16x128xbf16> to vector<16x128xf32>
    %93 = arith.addf %92, %89 : vector<16x128xf32>
    %c0_77 = arith.constant 0 : index
    %c0_78 = arith.constant 0 : index
    %94 = vector.load %arg11[%c0_77, %c0_78] : memref<16x128xf32, #tpu.memory_space<vmem>>, vector<16x128xf32>
    tpu.vector_store %arg11[%c0_77, %c0_78], %93 {strides = array<i32>} : memref<16x128xf32, #tpu.memory_space<vmem>>, vector<16x128xf32>,
    return
  }
}

</mosaic_0001>

<llo_original>
// kernel: tpu_custom_call.1
$region0: #{tpu_custom_call.1}
  #allocation0 [shape = 'u32[]', space=smem, size = 0x4, offset = 0x4, fixed_abs, tag = 'smem constant byte address 0x4 - core index']
  #allocation1 [shape = 'u32[144,128]{1,0:T(1,128)}', space=vmem, size = 0x12000, scoped, tag = 'internal scratch']
  #allocation2 [shape = 'bf16[2,17,256]{2,1,0:T(8,128)(2,1)}', space=vmem, size = 0x6000, scoped, tag = 'scratch operand']
  #allocation3 [shape = 'bf16[16,384]{1,0:T(16,128)(2,1)}', space=vmem, size = 0x3000, scoped, tag = 'scratch operand']
  #allocation4 [shape = 'bf16[16,768]{1,0:T(16,128)(2,1)}', space=vmem, size = 0x6000, scoped, tag = 'scratch operand']
  %s0 = inlined_call_operand.vmem [shape: bf16[2,10,128], index: 0, kind: input, shape index: {}]
  %s1 = inlined_call_operand.vmem [shape: bf16[384,256], index: 1, kind: input, shape index: {}]
  %s2 = inlined_call_operand.vmem [shape: f32[256,8], index: 2, kind: input, shape index: {}]
  %s3 = inlined_call_operand.vmem [shape: f32[8,256], index: 3, kind: input, shape index: {}]
  %s4 = inlined_call_operand.vmem [shape: f32[1,8], index: 4, kind: input, shape index: {}]
  %s5 = inlined_call_operand.vmem [shape: f32[1,8], index: 5, kind: input, shape index: {}]
  %s6 = inlined_call_operand.hbm [shape: bf16[768,128], index: 6, kind: input, shape index: {}]
  %s7 = inlined_call_operand.vmem [shape: f32[128,4], index: 7, kind: input, shape index: {}]
  %s8 = inlined_call_operand.vmem [shape: f32[4,128], index: 8, kind: input, shape index: {}]
  %s9 = inlined_call_operand.vmem [shape: f32[1,4], index: 9, kind: input, shape index: {}]
  %s10 = inlined_call_operand.vmem [shape: f32[1,4], index: 10, kind: input, shape index: {}]
  %s11 = inlined_call_operand.hbm [shape: f32[16,128], index: 11, kind: output, shape index: {}]
  %s12 = sld [smem:[#allocation0]]
  $region58: #{tpu_custom_call.1} parent=0
    _
  %s14 = ssub.s32 1, %s12
  %s15 = scalar_select 0, %s14, %s12
  $region1: #{tpu_custom_call.1} parent=0
    #allocation5 [shape = 'u8[196608]{0}', space=vmem, size = 0x30000, scoped, tag = 'input window, operand 6, single buffered']
    #allocation6 [shape = 's32[1]{0}', space=sflag, size = 0x4, scoped, tag = 'scoped memory for tpu_custom_call.1']
    #allocation7 [shape = 's32[1]{0}', space=sflag, size = 0x4, scoped, tag = 'scoped memory for tpu_custom_call.1']
    #allocation8 [shape = 'u8[8192]{0}', space=vmem, size = 0x2000, scoped, tag = 'output window, operand 0, single buffered']
    %16 = vsyncpa [#allocation6], 0
    %17 = vsyncpa [#allocation7], 0
    // Predicated region
    $region2: #{tpu_custom_call.1} parent=1 // pred_check
      _
    $region3: #{tpu_custom_call.1} parent=1 // pred_check_branch
      %19 = sbr.rel (0) target = $region5
    $region4: #{tpu_custom_call.1} parent=1 // pred_region
      _
    $region5: #{tpu_custom_call.1} parent=1 // pred_fallthru
      _
    // Predicated region
    $region6: #{tpu_custom_call.1} parent=1 // pred_check
      _
    $region7: #{tpu_custom_call.1} parent=1 // pred_check_branch
      %21 = sbr.rel (0) target = $region9
    $region8: #{tpu_custom_call.1} parent=1 // pred_region
      _
    $region9: #{tpu_custom_call.1} parent=1 // pred_fallthru
      _
    // Predicated region
    $region10: #{tpu_custom_call.1} parent=1 // pred_check
      _
    $region11: #{tpu_custom_call.1} parent=1 // pred_check_branch
      %23 = sbr.rel (0) target = $region13
    $region12: #{tpu_custom_call.1} parent=1 // pred_region
      _
    $region13: #{tpu_custom_call.1} parent=1 // pred_fallthru
      _
    // Predicated region
    $region14: #{tpu_custom_call.1} parent=1 // pred_check
      _
    $region15: #{tpu_custom_call.1} parent=1 // pred_check_branch
      %25 = sbr.rel (0) target = $region17
    $region16: #{tpu_custom_call.1} parent=1 // pred_region
      _
    $region17: #{tpu_custom_call.1} parent=1 // pred_fallthru
      _
    // Predicated region
    $region18: #{tpu_custom_call.1} parent=1 // pred_check
      _
    $region19: #{tpu_custom_call.1} parent=1 // pred_check_branch
      %27 = sbr.rel (0) target = $region21
    $region20: #{tpu_custom_call.1} parent=1 // pred_region
      _
    $region21: #{tpu_custom_call.1} parent=1 // pred_fallthru
      _
    // Predicated region
    $region22: #{tpu_custom_call.1} parent=1 // pred_check
      _
    $region23: #{tpu_custom_call.1} parent=1 // pred_check_branch
      %29 = sbr.rel (0) target = $region25
    $region24: #{tpu_custom_call.1} parent=1 // pred_region
      _
    $region25: #{tpu_custom_call.1} parent=1 // pred_fallthru
      _
    // Predicated region
    $region26: #{tpu_custom_call.1} parent=1 // pred_check
      _
    $region27: #{tpu_custom_call.1} parent=1 // pred_check_branch
      %31 = sbr.rel (0) target = $region29
    $region28: #{tpu_custom_call.1} parent=1 // pred_region
      %s33 = ssub.s32 6144, 6144
      %34 = vsyncadd [#allocation6], %s33
      %s35 = sshll.u32 [#allocation5], 4
      %s36 = int_to_ptr.vmem [resolvable:$true] %s35
      %41 = dma.hbm_to_vmem [thread:$0]  %s6, 6144, %s36, [#allocation6], 64, 64, 4
    $region29: #{tpu_custom_call.1} parent=1 // pred_fallthru
      _
    // Predicated region
    $region30: #{tpu_custom_call.1} parent=1 // pred_check
      _
    $region31: #{tpu_custom_call.1} parent=1 // pred_check_branch
      %43 = sbr.rel (0) target = $region33
    $region32: #{tpu_custom_call.1} parent=1 // pred_region
      _
    $region33: #{tpu_custom_call.1} parent=1 // pred_fallthru
      _
    // Predicated region
    $region34: #{tpu_custom_call.1} parent=1 // pred_check
      _
    $region35: #{tpu_custom_call.1} parent=1 // pred_check_branch
      %45 = sbr.rel (0) target = $region37
    $region36: #{tpu_custom_call.1} parent=1 // pred_region
      _
    $region37: #{tpu_custom_call.1} parent=1 // pred_fallthru
      _
    // Predicated region
    $region38: #{tpu_custom_call.1} parent=1 // pred_check
      _
    $region39: #{tpu_custom_call.1} parent=1 // pred_check_branch
      %47 = sbr.rel (0) target = $region41
    $region40: #{tpu_custom_call.1} parent=1 // pred_region
      _
    $region41: #{tpu_custom_call.1} parent=1 // pred_fallthru
      _
    // Predicated region
    $region42: #{tpu_custom_call.1} parent=1 // pred_check
      _
    $region43: #{tpu_custom_call.1} parent=1 // pred_check_branch
      %49 = sbr.rel (0) target = $region45
    $region44: #{tpu_custom_call.1} parent=1 // pred_region
      _
    $region45: #{tpu_custom_call.1} parent=1 // pred_fallthru
      _
    // Predicated region
    $region46: #{tpu_custom_call.1} parent=1 // pred_check
      _
    $region47: #{tpu_custom_call.1} parent=1 // pred_check_branch
      %51 = sbr.rel (0) target = $region49
    $region48: #{tpu_custom_call.1} parent=1 // pred_region
      %52 = dma.done [#allocation6], 6144
    $region49: #{tpu_custom_call.1} parent=1 // pred_fallthru
      _
    %v54 = vld [vmem:[%s0] sm:$0xf]
    %v55 = vld [vmem:[%s0 + $0x8] sm:$0xf]
    %v58 = vunpack.c.l.b16 %v54
    %v59 = vunpack.c.l.b16 %v55
    %v60 = vpack.c.b16 %v59, %v58
    %62 = vst [vmem:[#allocation3] sm:$0xff] %v60
    %v63 = vld [vmem:[%s0] sm:$0xf]
    %v64 = vld [vmem:[%s0 + $0x4] sm:$0x1]
    %v65 = vld [vmem:[%s0 + $0x8] sm:$0xf]
    %v66 = vld [vmem:[%s0 + $0xc] sm:$0x1]
    %vm67 = vsmask.f32 3328
    %vm68 = vsmask.f32 7440
    %vm69 = vmor %vm67, %vm68
    %v71 = vshrl.u32 %v63, 16
    %v73 = vrot.slane %v71, 4
    %v74 = vshll.u32 %v63, 16
    %v76 = vrot.slane %v74, 5
    %v77 = vor.u32 %v73, %v76
    %v78 = vrot.slane %v77, 4
    %v80 = vshll.u32 %v64, 16
    %v82 = vrot.slane %v80, 5
    %v83 = vsel %vm69, %v78, %v82
    %v85 = vshrl.u32 %v65, 16
    %v87 = vrot.slane %v85, 4
    %v88 = vshll.u32 %v65, 16
    %v90 = vrot.slane %v88, 5
    %v91 = vor.u32 %v87, %v90
    %v92 = vrot.slane %v91, 4
    %v94 = vshll.u32 %v66, 16
    %v96 = vrot.slane %v94, 5
    %v97 = vsel %vm69, %v92, %v96
    %v98 = vunpack.c.l.b16 %v83
    %v99 = vunpack.c.l.b16 %v97
    %v100 = vpack.c.b16 %v99, %v98
    %102 = vst [vmem:[#allocation3 + $0x8] sm:$0xff] %v100
    %v103 = vld [vmem:[%s0] sm:$0xe]
    %v104 = vld [vmem:[%s0 + $0x4] sm:$0x1]
    %v105 = vld [vmem:[%s0 + $0x8] sm:$0xe]
    %v106 = vld [vmem:[%s0 + $0xc] sm:$0x1]
    %vm111 = vcmask 1042432
    %vm112 = vcmask 1046532
    %vm113 = vmor %vm111, %vm112
    %v114 = vrot.slane %v103, 5
    %v115 = vrot.slane %v114, 4
    %v116 = vrot.slane %v104, 5
    %v117 = vsel %vm113, %v115, %v116
    %v118 = vrot.slane %v105, 5
    %v119 = vrot.slane %v118, 4
    %v120 = vrot.slane %v106, 5
    %v121 = vsel %vm113, %v119, %v120
    %v122 = vunpack.c.l.b16 %v117
    %v123 = vunpack.c.l.b16 %v121
    %v124 = vpack.c.b16 %v123, %v122
    %126 = vst [vmem:[#allocation3 + $0x10] sm:$0xff] %v124
    %v127 = vld [vmem:[#allocation3] sm:$0xff]
    %v128 = vld [vmem:[#allocation3 + $0x8] sm:$0xff]
    %v129 = vld [vmem:[#allocation3 + $0x10] sm:$0xff]
    %v130 = vld [vmem:[%s1] sm:$0xff]
    %v131 = vld [vmem:[%s1 + $0x8] sm:$0xff]
    %v132 = vld [vmem:[%s1 + $0x10] sm:$0xff]
    %v133 = vld [vmem:[%s1 + $0x18] sm:$0xff]
    %v134 = vld [vmem:[%s1 + $0x20] sm:$0xff]
    %v135 = vld [vmem:[%s1 + $0x28] sm:$0xff]
    %v136 = vld [vmem:[%s1 + $0x30] sm:$0xff]
    %v137 = vld [vmem:[%s1 + $0x38] sm:$0xff]
    %v138 = vld [vmem:[%s1 + $0x40] sm:$0xff]
    %v139 = vld [vmem:[%s1 + $0x48] sm:$0xff]
    %v140 = vld [vmem:[%s1 + $0x50] sm:$0xff]
    %v141 = vld [vmem:[%s1 + $0x58] sm:$0xff]
    %v142 = vld [vmem:[%s1 + $0x60] sm:$0xff]
    %v143 = vld [vmem:[%s1 + $0x68] sm:$0xff]
    %v144 = vld [vmem:[%s1 + $0x70] sm:$0xff]
    %v145 = vld [vmem:[%s1 + $0x78] sm:$0xff]
    %v146 = vld [vmem:[%s1 + $0x80] sm:$0xff]
    %v147 = vld [vmem:[%s1 + $0x88] sm:$0xff]
    %v148 = vld [vmem:[%s1 + $0x90] sm:$0xff]
    %v149 = vld [vmem:[%s1 + $0x98] sm:$0xff]
    %v150 = vld [vmem:[%s1 + $0xa0] sm:$0xff]
    %v151 = vld [vmem:[%s1 + $0xa8] sm:$0xff]
    %v152 = vld [vmem:[%s1 + $0xb0] sm:$0xff]
    %v153 = vld [vmem:[%s1 + $0xb8] sm:$0xff]
    %v154 = vld [vmem:[%s1 + $0xc0] sm:$0xff]
    %v155 = vld [vmem:[%s1 + $0xc8] sm:$0xff]
    %v156 = vld [vmem:[%s1 + $0xd0] sm:$0xff]
    %v157 = vld [vmem:[%s1 + $0xd8] sm:$0xff]
    %v158 = vld [vmem:[%s1 + $0xe0] sm:$0xff]
    %v159 = vld [vmem:[%s1 + $0xe8] sm:$0xff]
    %v160 = vld [vmem:[%s1 + $0xf0] sm:$0xff]
    %v161 = vld [vmem:[%s1 + $0xf8] sm:$0xff]
    %v162 = vld [vmem:[%s1 + $0x100] sm:$0xff]
    %v163 = vld [vmem:[%s1 + $0x108] sm:$0xff]
    %v164 = vld [vmem:[%s1 + $0x110] sm:$0xff]
    %v165 = vld [vmem:[%s1 + $0x118] sm:$0xff]
    %v166 = vld [vmem:[%s1 + $0x120] sm:$0xff]
    %v167 = vld [vmem:[%s1 + $0x128] sm:$0xff]
    %v168 = vld [vmem:[%s1 + $0x130] sm:$0xff]
    %v169 = vld [vmem:[%s1 + $0x138] sm:$0xff]
    %v170 = vld [vmem:[%s1 + $0x140] sm:$0xff]
    %v171 = vld [vmem:[%s1 + $0x148] sm:$0xff]
    %v172 = vld [vmem:[%s1 + $0x150] sm:$0xff]
    %v173 = vld [vmem:[%s1 + $0x158] sm:$0xff]
    %v174 = vld [vmem:[%s1 + $0x160] sm:$0xff]
    %v175 = vld [vmem:[%s1 + $0x168] sm:$0xff]
    %v176 = vld [vmem:[%s1 + $0x170] sm:$0xff]
    %v177 = vld [vmem:[%s1 + $0x178] sm:$0xff]
    %v226 = vunpack.c.l.b16 %v130
    %v227 = vunpack.c.h.b16 %v130
    %v228 = vunpack.c.l.b16 %v131
    %v229 = vunpack.c.h.b16 %v131
    %v230 = vunpack.c.l.b16 %v132
    %v231 = vunpack.c.h.b16 %v132
    %v232 = vunpack.c.l.b16 %v133
    %v233 = vunpack.c.h.b16 %v133
    %v234 = vunpack.c.l.b16 %v134
    %v235 = vunpack.c.h.b16 %v134
    %v236 = vunpack.c.l.b16 %v135
    %v237 = vunpack.c.h.b16 %v135
    %v238 = vunpack.c.l.b16 %v136
    %v239 = vunpack.c.h.b16 %v136
    %v240 = vunpack.c.l.b16 %v137
    %v241 = vunpack.c.h.b16 %v137
    %v242 = vunpack.c.l.b16 %v138
    %v243 = vunpack.c.h.b16 %v138
    %v244 = vunpack.c.l.b16 %v139
    %v245 = vunpack.c.h.b16 %v139
    %v246 = vunpack.c.l.b16 %v140
    %v247 = vunpack.c.h.b16 %v140
    %v248 = vunpack.c.l.b16 %v141
    %v249 = vunpack.c.h.b16 %v141
    %v250 = vunpack.c.l.b16 %v142
    %v251 = vunpack.c.h.b16 %v142
    %v252 = vunpack.c.l.b16 %v143
    %v253 = vunpack.c.h.b16 %v143
    %v254 = vunpack.c.l.b16 %v144
    %v255 = vunpack.c.h.b16 %v144
    %v256 = vunpack.c.l.b16 %v145
    %v257 = vunpack.c.h.b16 %v145
    %v258 = vunpack.c.l.b16 %v146
    %v259 = vunpack.c.h.b16 %v146
    %v260 = vunpack.c.l.b16 %v147
    %v261 = vunpack.c.h.b16 %v147
    %v262 = vunpack.c.l.b16 %v148
    %v263 = vunpack.c.h.b16 %v148
    %v264 = vunpack.c.l.b16 %v149
    %v265 = vunpack.c.h.b16 %v149
    %v266 = vunpack.c.l.b16 %v150
    %v267 = vunpack.c.h.b16 %v150
    %v268 = vunpack.c.l.b16 %v151
    %v269 = vunpack.c.h.b16 %v151
    %v270 = vunpack.c.l.b16 %v152
    %v271 = vunpack.c.h.b16 %v152
    %v272 = vunpack.c.l.b16 %v153
    %v273 = vunpack.c.h.b16 %v153
    %v274 = vunpack.c.l.b16 %v154
    %v275 = vunpack.c.h.b16 %v154
    %v276 = vunpack.c.l.b16 %v155
    %v277 = vunpack.c.h.b16 %v155
    %v278 = vunpack.c.l.b16 %v156
    %v279 = vunpack.c.h.b16 %v156
    %v280 = vunpack.c.l.b16 %v157
    %v281 = vunpack.c.h.b16 %v157
    %v282 = vunpack.c.l.b16 %v158
    %v283 = vunpack.c.h.b16 %v158
    %v284 = vunpack.c.l.b16 %v159
    %v285 = vunpack.c.h.b16 %v159
    %v286 = vunpack.c.l.b16 %v160
    %v287 = vunpack.c.h.b16 %v160
    %v288 = vunpack.c.l.b16 %v161
    %v289 = vunpack.c.h.b16 %v161
    %v290 = vunpack.c.l.b16 %v162
    %v291 = vunpack.c.h.b16 %v162
    %v292 = vunpack.c.l.b16 %v163
    %v293 = vunpack.c.h.b16 %v163
    %v294 = vunpack.c.l.b16 %v164
    %v295 = vunpack.c.h.b16 %v164
    %v296 = vunpack.c.l.b16 %v165
    %v297 = vunpack.c.h.b16 %v165
    %v298 = vunpack.c.l.b16 %v166
    %v299 = vunpack.c.h.b16 %v166
    %v300 = vunpack.c.l.b16 %v167
    %v301 = vunpack.c.h.b16 %v167
    %v302 = vunpack.c.l.b16 %v168
    %v303 = vunpack.c.h.b16 %v168
    %v304 = vunpack.c.l.b16 %v169
    %v305 = vunpack.c.h.b16 %v169
    %v306 = vunpack.c.l.b16 %v170
    %v307 = vunpack.c.h.b16 %v170
    %v308 = vunpack.c.l.b16 %v171
    %v309 = vunpack.c.h.b16 %v171
    %v310 = vunpack.c.l.b16 %v172
    %v311 = vunpack.c.h.b16 %v172
    %v312 = vunpack.c.l.b16 %v173
    %v313 = vunpack.c.h.b16 %v173
    %v314 = vunpack.c.l.b16 %v174
    %v315 = vunpack.c.h.b16 %v174
    %v316 = vunpack.c.l.b16 %v175
    %v317 = vunpack.c.h.b16 %v175
    %v318 = vunpack.c.l.b16 %v176
    %v319 = vunpack.c.h.b16 %v176
    %v320 = vunpack.c.l.b16 %v177
    %v321 = vunpack.c.h.b16 %v177
    %v322 = vpack.c.b16 %v228, %v226
    %v323 = vpack.c.b16 %v229, %v227
    %v324 = vpack.c.b16 %v232, %v230
    %v325 = vpack.c.b16 %v233, %v231
    %v326 = vpack.c.b16 %v236, %v234
    %v327 = vpack.c.b16 %v237, %v235
    %v328 = vpack.c.b16 %v240, %v238
    %v329 = vpack.c.b16 %v241, %v239
    %v330 = vpack.c.b16 %v244, %v242
    %v331 = vpack.c.b16 %v245, %v243
    %v332 = vpack.c.b16 %v248, %v246
    %v333 = vpack.c.b16 %v249, %v247
    %v334 = vpack.c.b16 %v252, %v250
    %v335 = vpack.c.b16 %v253, %v251
    %v336 = vpack.c.b16 %v256, %v254
    %v337 = vpack.c.b16 %v257, %v255
    %v338 = vpack.c.b16 %v260, %v258
    %v339 = vpack.c.b16 %v261, %v259
    %v340 = vpack.c.b16 %v264, %v262
    %v341 = vpack.c.b16 %v265, %v263
    %v342 = vpack.c.b16 %v268, %v266
    %v343 = vpack.c.b16 %v269, %v267
    %v344 = vpack.c.b16 %v272, %v270
    %v345 = vpack.c.b16 %v273, %v271
    %v346 = vpack.c.b16 %v276, %v274
    %v347 = vpack.c.b16 %v277, %v275
    %v348 = vpack.c.b16 %v280, %v278
    %v349 = vpack.c.b16 %v281, %v279
    %v350 = vpack.c.b16 %v284, %v282
    %v351 = vpack.c.b16 %v285, %v283
    %v352 = vpack.c.b16 %v288, %v286
    %v353 = vpack.c.b16 %v289, %v287
    %v354 = vpack.c.b16 %v292, %v290
    %v355 = vpack.c.b16 %v293, %v291
    %v356 = vpack.c.b16 %v296, %v294
    %v357 = vpack.c.b16 %v297, %v295
    %v358 = vpack.c.b16 %v300, %v298
    %v359 = vpack.c.b16 %v301, %v299
    %v360 = vpack.c.b16 %v304, %v302
    %v361 = vpack.c.b16 %v305, %v303
    %v362 = vpack.c.b16 %v308, %v306
    %v363 = vpack.c.b16 %v309, %v307
    %v364 = vpack.c.b16 %v312, %v310
    %v365 = vpack.c.b16 %v313, %v311
    %v366 = vpack.c.b16 %v316, %v314
    %v367 = vpack.c.b16 %v317, %v315
    %v368 = vpack.c.b16 %v320, %v318
    %v369 = vpack.c.b16 %v321, %v319
    %418 = vmatprep.subr.bf16.mxu0 %v323
    %419 = vmatpush1.bf16.msra.mxu0 %v322
    %420 = vmatprep.subr.bf16.mxu0 %v325
    %421 = vmatpush1.bf16.msra.mxu0 %v324
    %422 = vmatprep.subr.bf16.mxu0 %v327
    %423 = vmatpush1.bf16.msra.mxu0 %v326
    %424 = vmatprep.subr.bf16.mxu0 %v329
    %425 = vmatpush1.bf16.msra.mxu0 %v328
    %426 = vmatprep.subr.bf16.mxu0 %v331
    %427 = vmatpush1.bf16.msra.mxu0 %v330
    %428 = vmatprep.subr.bf16.mxu0 %v333
    %429 = vmatpush1.bf16.msra.mxu0 %v332
    %430 = vmatprep.subr.bf16.mxu0 %v335
    %431 = vmatpush1.bf16.msra.mxu0 %v334
    %432 = vmatprep.subr.bf16.mxu0 %v337
    %433 = vmatpush1.bf16.msra.mxu0 %v336
    %434 = vmatprep.subr.bf16.mxu0 %v339
    %435 = vmatpush1.bf16.msra.mxu0 %v338
    %436 = vmatprep.subr.bf16.mxu0 %v341
    %437 = vmatpush1.bf16.msra.mxu0 %v340
    %438 = vmatprep.subr.bf16.mxu0 %v343
    %439 = vmatpush1.bf16.msra.mxu0 %v342
    %440 = vmatprep.subr.bf16.mxu0 %v345
    %441 = vmatpush1.bf16.msra.mxu0 %v344
    %442 = vmatprep.subr.bf16.mxu0 %v347
    %443 = vmatpush1.bf16.msra.mxu0 %v346
    %444 = vmatprep.subr.bf16.mxu0 %v349
    %445 = vmatpush1.bf16.msra.mxu0 %v348
    %446 = vmatprep.subr.bf16.mxu0 %v351
    %447 = vmatpush1.bf16.msra.mxu0 %v350
    %448 = vmatprep.subr.bf16.mxu0 %v353
    %449 = vmatpush1.bf16.msra.mxu0 %v352
    %450 = vmatprep.mubr.bf16.mxu0 %v128
    %451 = vmatmul.mubr.bf16.gmra.mrb[0].mxu0 %v127
    %v452 = vpop.f32.mrb[0].mxu0
    %v453 = vadd.f32 0.0, %v452
    %v454 = vpop.f32.mrb[0].mxu0
    %v455 = vadd.f32 0.0, %v454
    %v456 = vpop.f32.mrb[0].mxu0
    %v457 = vadd.f32 0.0, %v456
    %v458 = vpop.f32.mrb[0].mxu0
    %v459 = vadd.f32 0.0, %v458
    %460 = vdwg.mxu0
    %461 = vmatprep.subr.bf16.mxu0 %v355
    %462 = vmatpush1.bf16.msra.mxu0 %v354
    %463 = vmatprep.subr.bf16.mxu0 %v357
    %464 = vmatpush1.bf16.msra.mxu0 %v356
    %465 = vmatprep.subr.bf16.mxu0 %v359
    %466 = vmatpush1.bf16.msra.mxu0 %v358
    %467 = vmatprep.subr.bf16.mxu0 %v361
    %468 = vmatpush1.bf16.msra.mxu0 %v360
    %469 = vmatprep.subr.bf16.mxu0 %v363
    %470 = vmatpush1.bf16.msra.mxu0 %v362
    %471 = vmatprep.subr.bf16.mxu0 %v365
    %472 = vmatpush1.bf16.msra.mxu0 %v364
    %473 = vmatprep.subr.bf16.mxu0 %v367
    %474 = vmatpush1.bf16.msra.mxu0 %v366
    %475 = vmatprep.subr.bf16.mxu0 %v369
    %476 = vmatpush1.bf16.msra.mxu0 %v368
    %477 = vmatprep.subr.bf16.mxu0 0
    %478 = vmatpush1.bf16.msra.mxu0 0
    %479 = vmatprep.subr.bf16.mxu0 0
    %480 = vmatpush1.bf16.msra.mxu0 0
    %481 = vmatprep.subr.bf16.mxu0 0
    %482 = vmatpush1.bf16.msra.mxu0 0
    %483 = vmatprep.subr.bf16.mxu0 0
    %484 = vmatpush1.bf16.msra.mxu0 0
    %485 = vmatprep.subr.bf16.mxu0 0
    %486 = vmatpush1.bf16.msra.mxu0 0
    %487 = vmatprep.subr.bf16.mxu0 0
    %488 = vmatpush1.bf16.msra.mxu0 0
    %489 = vmatprep.subr.bf16.mxu0 0
    %490 = vmatpush1.bf16.msra.mxu0 0
    %491 = vmatprep.subr.bf16.mxu0 0
    %492 = vmatpush1.bf16.msra.mxu0 0
    %493 = vmatprep.mubr.bf16.mxu0 0
    %494 = vmatmul.mubr.bf16.gmra.mrb[0].mxu0 %v129
    %v495 = vpop.f32.mrb[0].mxu0
    %v496 = vadd.f32 %v453, %v495
    %v497 = vpop.f32.mrb[0].mxu0
    %v498 = vadd.f32 %v455, %v497
    %v499 = vpop.f32.mrb[0].mxu0
    %v500 = vadd.f32 %v457, %v499
    %v501 = vpop.f32.mrb[0].mxu0
    %v502 = vadd.f32 %v459, %v501
    %503 = vdwg.mxu0
    %v504 = vld [vmem:[%s2] sm:$0xff]
    %v505 = vld [vmem:[%s2 + $0x8] sm:$0xff]
    %v506 = vld [vmem:[%s2 + $0x10] sm:$0xff]
    %v507 = vld [vmem:[%s2 + $0x18] sm:$0xff]
    %v508 = vld [vmem:[%s2 + $0x20] sm:$0xff]
    %v509 = vld [vmem:[%s2 + $0x28] sm:$0xff]
    %v510 = vld [vmem:[%s2 + $0x30] sm:$0xff]
    %v511 = vld [vmem:[%s2 + $0x38] sm:$0xff]
    %v512 = vld [vmem:[%s2 + $0x40] sm:$0xff]
    %v513 = vld [vmem:[%s2 + $0x48] sm:$0xff]
    %v514 = vld [vmem:[%s2 + $0x50] sm:$0xff]
    %v515 = vld [vmem:[%s2 + $0x58] sm:$0xff]
    %v516 = vld [vmem:[%s2 + $0x60] sm:$0xff]
    %v517 = vld [vmem:[%s2 + $0x68] sm:$0xff]
    %v518 = vld [vmem:[%s2 + $0x70] sm:$0xff]
    %v519 = vld [vmem:[%s2 + $0x78] sm:$0xff]
    %v520 = vld [vmem:[%s2 + $0x80] sm:$0xff]
    %v521 = vld [vmem:[%s2 + $0x88] sm:$0xff]
    %v522 = vld [vmem:[%s2 + $0x90] sm:$0xff]
    %v523 = vld [vmem:[%s2 + $0x98] sm:$0xff]
    %v524 = vld [vmem:[%s2 + $0xa0] sm:$0xff]
    %v525 = vld [vmem:[%s2 + $0xa8] sm:$0xff]
    %v526 = vld [vmem:[%s2 + $0xb0] sm:$0xff]
    %v527 = vld [vmem:[%s2 + $0xb8] sm:$0xff]
    %v528 = vld [vmem:[%s2 + $0xc0] sm:$0xff]
    %v529 = vld [vmem:[%s2 + $0xc8] sm:$0xff]
    %v530 = vld [vmem:[%s2 + $0xd0] sm:$0xff]
    %v531 = vld [vmem:[%s2 + $0xd8] sm:$0xff]
    %v532 = vld [vmem:[%s2 + $0xe0] sm:$0xff]
    %v533 = vld [vmem:[%s2 + $0xe8] sm:$0xff]
    %v534 = vld [vmem:[%s2 + $0xf0] sm:$0xff]
    %v535 = vld [vmem:[%s2 + $0xf8] sm:$0xff]
    %v536 = vld [vmem:[%s3] sm:$0xff]
    %v537 = vld [vmem:[%s3 + $0x8] sm:$0xff]
    %v538 = vld [vmem:[%s4] sm:$0x1]
    %v539 = vld [vmem:[%s5] sm:$0x1]
    %v540 = vadd.f32 %v496, %v500
    %v541 = vrot.slane %v540, 4
    %v542 = vadd.f32 %v540, %v541
    %v543 = vrot.slane %v542, 2
    %v544 = vadd.f32 %v542, %v543
    %v545 = vrot.slane %v544, 1
    %v546 = vadd.f32 %v544, %v545
    %v547 = vadd.f32 %v498, %v502
    %v548 = vrot.slane %v547, 4
    %v549 = vadd.f32 %v547, %v548
    %v550 = vrot.slane %v549, 2
    %v551 = vadd.f32 %v549, %v550
    %v552 = vrot.slane %v551, 1
    %v553 = vadd.f32 %v551, %v552
    %v554 = vmul.f32 %v496, %v496
    %v555 = vmul.f32 %v498, %v498
    %v556 = vmul.f32 %v500, %v500
    %v557 = vmul.f32 %v502, %v502
    %v558 = vadd.f32 %v554, %v556
    %v559 = vrot.slane %v558, 4
    %v560 = vadd.f32 %v558, %v559
    %v561 = vrot.slane %v560, 2
    %v562 = vadd.f32 %v560, %v561
    %v563 = vrot.slane %v562, 1
    %v564 = vadd.f32 %v562, %v563
    %v565 = vadd.f32 %v555, %v557
    %v566 = vrot.slane %v565, 4
    %v567 = vadd.f32 %v565, %v566
    %v568 = vrot.slane %v567, 2
    %v569 = vadd.f32 %v567, %v568
    %v570 = vrot.slane %v569, 1
    %v571 = vadd.f32 %v569, %v570
    %572 = vmatprep.subr.mxu0 0.0
    %573 = vmatpush1.msra.mxu0 %v504
    %574 = vmatprep.subr.mxu0 0.0
    %575 = vmatpush1.msra.mxu0 %v505
    %576 = vmatprep.subr.mxu0 0.0
    %577 = vmatpush1.msra.mxu0 %v506
    %578 = vmatprep.subr.mxu0 0.0
    %579 = vmatpush1.msra.mxu0 %v507
    %580 = vmatprep.subr.mxu0 0.0
    %581 = vmatpush1.msra.mxu0 %v508
    %582 = vmatprep.subr.mxu0 0.0
    %583 = vmatpush1.msra.mxu0 %v509
    %584 = vmatprep.subr.mxu0 0.0
    %585 = vmatpush1.msra.mxu0 %v510
    %586 = vmatprep.subr.mxu0 0.0
    %587 = vmatpush1.msra.mxu0 %v511
    %588 = vmatprep.subr.mxu0 0.0
    %589 = vmatpush1.msra.mxu0 %v512
    %590 = vmatprep.subr.mxu0 0.0
    %591 = vmatpush1.msra.mxu0 %v513
    %592 = vmatprep.subr.mxu0 0.0
    %593 = vmatpush1.msra.mxu0 %v514
    %594 = vmatprep.subr.mxu0 0.0
    %595 = vmatpush1.msra.mxu0 %v515
    %596 = vmatprep.subr.mxu0 0.0
    %597 = vmatpush1.msra.mxu0 %v516
    %598 = vmatprep.subr.mxu0 0.0
    %599 = vmatpush1.msra.mxu0 %v517
    %600 = vmatprep.subr.mxu0 0.0
    %601 = vmatpush1.msra.mxu0 %v518
    %602 = vmatprep.subr.mxu0 0.0
    %603 = vmatpush1.msra.mxu0 %v519
    %604 = vmatprep.subr.mxu0 0.0
    %605 = vmatpush1.msra.mxu0 %v520
    %606 = vmatprep.subr.mxu0 0.0
    %607 = vmatpush1.msra.mxu0 %v521
    %608 = vmatprep.subr.mxu0 0.0
    %609 = vmatpush1.msra.mxu0 %v522
    %610 = vmatprep.subr.mxu0 0.0
    %611 = vmatpush1.msra.mxu0 %v523
    %612 = vmatprep.subr.mxu0 0.0
    %613 = vmatpush1.msra.mxu0 %v524
    %614 = vmatprep.subr.mxu0 0.0
    %615 = vmatpush1.msra.mxu0 %v525
    %616 = vmatprep.subr.mxu0 0.0
    %617 = vmatpush1.msra.mxu0 %v526
    %618 = vmatprep.subr.mxu0 0.0
    %619 = vmatpush1.msra.mxu0 %v527
    %620 = vmatprep.subr.mxu0 0.0
    %621 = vmatpush1.msra.mxu0 %v528
    %622 = vmatprep.subr.mxu0 0.0
    %623 = vmatpush1.msra.mxu0 %v529
    %624 = vmatprep.subr.mxu0 0.0
    %625 = vmatpush1.msra.mxu0 %v530
    %626 = vmatprep.subr.mxu0 0.0
    %627 = vmatpush1.msra.mxu0 %v531
    %628 = vmatprep.subr.mxu0 0.0
    %629 = vmatpush1.msra.mxu0 %v532
    %630 = vmatprep.subr.mxu0 0.0
    %631 = vmatpush1.msra.mxu0 %v533
    %632 = vmatprep.subr.mxu0 0.0
    %633 = vmatpush1.msra.mxu0 %v534
    %634 = vmatprep.subr.mxu0 0.0
    %635 = vmatpush1.msra.mxu0 %v535
    %636 = vmatprep.mubr.f32.mxu0 %v553
    %637 = vmatmul.mubr.f32.gmra.mrb[0].mxu0 %v546
    %v638 = vpop.f32.mrb[0].mxu0
    %v639 = vadd.f32 0.0, %v638
    %v640 = vpop.f32.mrb[0].mxu0
    %641 = vdwg.mxu0
    %v642 = vmul.f32 %v639, 0.001953125
    %643 = vmatprep.subr.mxu0 0.0
    %644 = vmatpush1.msra.mxu0 %v504
    %645 = vmatprep.subr.mxu0 0.0
    %646 = vmatpush1.msra.mxu0 %v505
    %647 = vmatprep.subr.mxu0 0.0
    %648 = vmatpush1.msra.mxu0 %v506
    %649 = vmatprep.subr.mxu0 0.0
    %650 = vmatpush1.msra.mxu0 %v507
    %651 = vmatprep.subr.mxu0 0.0
    %652 = vmatpush1.msra.mxu0 %v508
    %653 = vmatprep.subr.mxu0 0.0
    %654 = vmatpush1.msra.mxu0 %v509
    %655 = vmatprep.subr.mxu0 0.0
    %656 = vmatpush1.msra.mxu0 %v510
    %657 = vmatprep.subr.mxu0 0.0
    %658 = vmatpush1.msra.mxu0 %v511
    %659 = vmatprep.subr.mxu0 0.0
    %660 = vmatpush1.msra.mxu0 %v512
    %661 = vmatprep.subr.mxu0 0.0
    %662 = vmatpush1.msra.mxu0 %v513
    %663 = vmatprep.subr.mxu0 0.0
    %664 = vmatpush1.msra.mxu0 %v514
    %665 = vmatprep.subr.mxu0 0.0
    %666 = vmatpush1.msra.mxu0 %v515
    %667 = vmatprep.subr.mxu0 0.0
    %668 = vmatpush1.msra.mxu0 %v516
    %669 = vmatprep.subr.mxu0 0.0
    %670 = vmatpush1.msra.mxu0 %v517
    %671 = vmatprep.subr.mxu0 0.0
    %672 = vmatpush1.msra.mxu0 %v518
    %673 = vmatprep.subr.mxu0 0.0
    %674 = vmatpush1.msra.mxu0 %v519
    %675 = vmatprep.subr.mxu0 0.0
    %676 = vmatpush1.msra.mxu0 %v520
    %677 = vmatprep.subr.mxu0 0.0
    %678 = vmatpush1.msra.mxu0 %v521
    %679 = vmatprep.subr.mxu0 0.0
    %680 = vmatpush1.msra.mxu0 %v522
    %681 = vmatprep.subr.mxu0 0.0
    %682 = vmatpush1.msra.mxu0 %v523
    %683 = vmatprep.subr.mxu0 0.0
    %684 = vmatpush1.msra.mxu0 %v524
    %685 = vmatprep.subr.mxu0 0.0
    %686 = vmatpush1.msra.mxu0 %v525
    %687 = vmatprep.subr.mxu0 0.0
    %688 = vmatpush1.msra.mxu0 %v526
    %689 = vmatprep.subr.mxu0 0.0
    %690 = vmatpush1.msra.mxu0 %v527
    %691 = vmatprep.subr.mxu0 0.0
    %692 = vmatpush1.msra.mxu0 %v528
    %693 = vmatprep.subr.mxu0 0.0
    %694 = vmatpush1.msra.mxu0 %v529
    %695 = vmatprep.subr.mxu0 0.0
    %696 = vmatpush1.msra.mxu0 %v530
    %697 = vmatprep.subr.mxu0 0.0
    %698 = vmatpush1.msra.mxu0 %v531
    %699 = vmatprep.subr.mxu0 0.0
    %700 = vmatpush1.msra.mxu0 %v532
    %701 = vmatprep.subr.mxu0 0.0
    %702 = vmatpush1.msra.mxu0 %v533
    %703 = vmatprep.subr.mxu0 0.0
    %704 = vmatpush1.msra.mxu0 %v534
    %705 = vmatprep.subr.mxu0 0.0
    %706 = vmatpush1.msra.mxu0 %v535
    %707 = vmatprep.mubr.f32.mxu0 %v571
    %708 = vmatmul.mubr.f32.gmra.mrb[0].mxu0 %v564
    %v709 = vpop.f32.mrb[0].mxu0
    %v710 = vadd.f32 0.0, %v709
    %v711 = vpop.f32.mrb[0].mxu0
    %712 = vdwg.mxu0
    %v713 = vmul.f32 %v710, 0.001953125
    %v714 = vmul.f32 %v642, %v642
    %v715 = vsub.f32 %v713, %v714
    %v716 = vadd.f32 %v715, 1e-05
    %v717 = vrsqrt.pop %v716
    %v718 = vmul.f32 %v538, %v717
    %v719 = vmul.f32 %v642, %v718
    %v720 = vsub.f32 %v539, %v719
    %vm721 = vcmask 64512
    %v723 = vsel %vm721, %v718, 0
    %725 = vmatprep.subr.mxu0 %v537
    %726 = vmatpush1.msra.mxu0 %v536
    %727 = vmatprep.subr.mxu0 0.0
    %728 = vmatpush1.msra.mxu0 0.0
    %729 = vmatprep.subr.mxu0 0.0
    %730 = vmatpush1.msra.mxu0 0.0
    %731 = vmatprep.subr.mxu0 0.0
    %732 = vmatpush1.msra.mxu0 0.0
    %733 = vmatprep.subr.mxu0 0.0
    %734 = vmatpush1.msra.mxu0 0.0
    %735 = vmatprep.subr.mxu0 0.0
    %736 = vmatpush1.msra.mxu0 0.0
    %737 = vmatprep.subr.mxu0 0.0
    %738 = vmatpush1.msra.mxu0 0.0
    %739 = vmatprep.subr.mxu0 0.0
    %740 = vmatpush1.msra.mxu0 0.0
    %741 = vmatprep.subr.mxu0 0.0
    %742 = vmatpush1.msra.mxu0 0.0
    %743 = vmatprep.subr.mxu0 0.0
    %744 = vmatpush1.msra.mxu0 0.0
    %745 = vmatprep.subr.mxu0 0.0
    %746 = vmatpush1.msra.mxu0 0.0
    %747 = vmatprep.subr.mxu0 0.0
    %748 = vmatpush1.msra.mxu0 0.0
    %749 = vmatprep.subr.mxu0 0.0
    %750 = vmatpush1.msra.mxu0 0.0
    %751 = vmatprep.subr.mxu0 0.0
    %752 = vmatpush1.msra.mxu0 0.0
    %753 = vmatprep.subr.mxu0 0.0
    %754 = vmatpush1.msra.mxu0 0.0
    %755 = vmatprep.subr.mxu0 0.0
    %756 = vmatpush1.msra.mxu0 0.0
    %757 = vmatprep.subr.mxu0 0.0
    %758 = vmatpush1.msra.mxu0 0.0
    %759 = vmatprep.subr.mxu0 0.0
    %760 = vmatpush1.msra.mxu0 0.0
    %761 = vmatprep.subr.mxu0 0.0
    %762 = vmatpush1.msra.mxu0 0.0
    %763 = vmatprep.subr.mxu0 0.0
    %764 = vmatpush1.msra.mxu0 0.0
    %765 = vmatprep.subr.mxu0 0.0
    %766 = vmatpush1.msra.mxu0 0.0
    %767 = vmatprep.subr.mxu0 0.0
    %768 = vmatpush1.msra.mxu0 0.0
    %769 = vmatprep.subr.mxu0 0.0
    %770 = vmatpush1.msra.mxu0 0.0
    %771 = vmatprep.subr.mxu0 0.0
    %772 = vmatpush1.msra.mxu0 0.0
    %773 = vmatprep.subr.mxu0 0.0
    %774 = vmatpush1.msra.mxu0 0.0
    %775 = vmatprep.subr.mxu0 0.0
    %776 = vmatpush1.msra.mxu0 0.0
    %777 = vmatprep.subr.mxu0 0.0
    %778 = vmatpush1.msra.mxu0 0.0
    %779 = vmatprep.subr.mxu0 0.0
    %780 = vmatpush1.msra.mxu0 0.0
    %781 = vmatprep.subr.mxu0 0.0
    %782 = vmatpush1.msra.mxu0 0.0
    %783 = vmatprep.subr.mxu0 0.0
    %784 = vmatpush1.msra.mxu0 0.0
    %785 = vmatprep.subr.mxu0 0.0
    %786 = vmatpush1.msra.mxu0 0.0
    %787 = vmatprep.subr.mxu0 0.0
    %788 = vmatpush1.msra.mxu0 0.0
    %789 = vmatprep.mubr.f32.mxu0 0.0
    %790 = vmatmul.mubr.f32.gmra.mrb[0].mxu0 %v723
    %v791 = vpop.f32.mrb[0].mxu0
    %v792 = vadd.f32 0.0, %v791
    %v793 = vpop.f32.mrb[0].mxu0
    %v794 = vadd.f32 0.0, %v793
    %795 = vdwg.mxu0
    %v797 = vsel %vm721, %v720, 0
    %799 = vmatprep.subr.mxu0 %v537
    %800 = vmatpush1.msra.mxu0 %v536
    %801 = vmatprep.subr.mxu0 0.0
    %802 = vmatpush1.msra.mxu0 0.0
    %803 = vmatprep.subr.mxu0 0.0
    %804 = vmatpush1.msra.mxu0 0.0
    %805 = vmatprep.subr.mxu0 0.0
    %806 = vmatpush1.msra.mxu0 0.0
    %807 = vmatprep.subr.mxu0 0.0
    %808 = vmatpush1.msra.mxu0 0.0
    %809 = vmatprep.subr.mxu0 0.0
    %810 = vmatpush1.msra.mxu0 0.0
    %811 = vmatprep.subr.mxu0 0.0
    %812 = vmatpush1.msra.mxu0 0.0
    %813 = vmatprep.subr.mxu0 0.0
    %814 = vmatpush1.msra.mxu0 0.0
    %815 = vmatprep.subr.mxu0 0.0
    %816 = vmatpush1.msra.mxu0 0.0
    %817 = vmatprep.subr.mxu0 0.0
    %818 = vmatpush1.msra.mxu0 0.0
    %819 = vmatprep.subr.mxu0 0.0
    %820 = vmatpush1.msra.mxu0 0.0
    %821 = vmatprep.subr.mxu0 0.0
    %822 = vmatpush1.msra.mxu0 0.0
    %823 = vmatprep.subr.mxu0 0.0
    %824 = vmatpush1.msra.mxu0 0.0
    %825 = vmatprep.subr.mxu0 0.0
    %826 = vmatpush1.msra.mxu0 0.0
    %827 = vmatprep.subr.mxu0 0.0
    %828 = vmatpush1.msra.mxu0 0.0
    %829 = vmatprep.subr.mxu0 0.0
    %830 = vmatpush1.msra.mxu0 0.0
    %831 = vmatprep.subr.mxu0 0.0
    %832 = vmatpush1.msra.mxu0 0.0
    %833 = vmatprep.subr.mxu0 0.0
    %834 = vmatpush1.msra.mxu0 0.0
    %835 = vmatprep.subr.mxu0 0.0
    %836 = vmatpush1.msra.mxu0 0.0
    %837 = vmatprep.subr.mxu0 0.0
    %838 = vmatpush1.msra.mxu0 0.0
    %839 = vmatprep.subr.mxu0 0.0
    %840 = vmatpush1.msra.mxu0 0.0
    %841 = vmatprep.subr.mxu0 0.0
    %842 = vmatpush1.msra.mxu0 0.0
    %843 = vmatprep.subr.mxu0 0.0
    %844 = vmatpush1.msra.mxu0 0.0
    %845 = vmatprep.subr.mxu0 0.0
    %846 = vmatpush1.msra.mxu0 0.0
    %847 = vmatprep.subr.mxu0 0.0
    %848 = vmatpush1.msra.mxu0 0.0
    %849 = vmatprep.subr.mxu0 0.0
    %850 = vmatpush1.msra.mxu0 0.0
    %851 = vmatprep.subr.mxu0 0.0
    %852 = vmatpush1.msra.mxu0 0.0
    %853 = vmatprep.subr.mxu0 0.0
    %854 = vmatpush1.msra.mxu0 0.0
    %855 = vmatprep.subr.mxu0 0.0
    %856 = vmatpush1.msra.mxu0 0.0
    %857 = vmatprep.subr.mxu0 0.0
    %858 = vmatpush1.msra.mxu0 0.0
    %859 = vmatprep.subr.mxu0 0.0
    %860 = vmatpush1.msra.mxu0 0.0
    %861 = vmatprep.subr.mxu0 0.0
    %862 = vmatpush1.msra.mxu0 0.0
    %863 = vmatprep.mubr.f32.mxu0 0.0
    %864 = vmatmul.mubr.f32.gmra.mrb[0].mxu0 %v797
    %v865 = vpop.f32.mrb[0].mxu0
    %v866 = vadd.f32 0.0, %v865
    %v867 = vpop.f32.mrb[0].mxu0
    %v868 = vadd.f32 0.0, %v867
    %869 = vdwg.mxu0
    %v870 = vlaneseq
    %v871 = vshrl.u32 %v870, 7
    %v872 = vsub.s32 0, %v871
    %v873 = vrot.slane %v792, %v872
    %v874 = vlaneseq
    %v875 = vshrl.u32 %v874, 7
    %v876 = vsub.s32 0, %v875
    %v877 = vrot.slane %v794, %v876
    %v878 = vmul.f32 %v496, %v873
    %v879 = vmul.f32 %v498, %v877
    %v880 = vmul.f32 %v500, %v873
    %v881 = vmul.f32 %v502, %v877
    %v882 = vlaneseq
    %v883 = vshrl.u32 %v882, 7
    %v884 = vsub.s32 0, %v883
    %v885 = vrot.slane %v866, %v884
    %v886 = vlaneseq
    %v887 = vshrl.u32 %v886, 7
    %v888 = vsub.s32 0, %v887
    %v889 = vrot.slane %v868, %v888
    %v890 = vadd.f32 %v878, %v885
    %v891 = vadd.f32 %v879, %v889
    %v892 = vadd.f32 %v880, %v885
    %v893 = vadd.f32 %v881, %v889
    %v894 = vmax.f32 %v890, 0.0
    %v895 = vmax.f32 %v891, 0.0
    %v896 = vmax.f32 %v892, 0.0
    %v897 = vmax.f32 %v893, 0.0
    %vm898 = vcmask 1043459
    %vm899 = vsmask.f32 7950
    %vm900 = vmand %vm898, %vm899
    %vm901 = vcmask 1047559
    %vm902 = vsmask.f32 7966
    %vm903 = vmand %vm901, %vm902
    %vm904 = vmor %vm903, %vm900
    %v905 = vld [vmem:[#allocation2] sm:$0x88]
    %v906 = vsel %vm904, 0, %v905
    %907 = vst [vmem:[#allocation2] sm:$0x88] %v906
    %v908 = vld [vmem:[#allocation2 + $0x18] sm:$0x88]
    %v909 = vsel %vm904, 0, %v908
    %910 = vst [vmem:[#allocation2 + $0x18] sm:$0x88] %v909
    %vm911 = vcmask 1040384
    %vm912 = vsmask.f32 256
    %vm913 = vmand %vm911, %vm912
    %vm914 = vcmask 1044484
    %vm915 = vsmask.f32 4352
    %vm916 = vmand %vm914, %vm915
    %vm917 = vmor %vm916, %vm913
    %v918 = vld [vmem:[#allocation2 + $0x10] sm:$0x11]
    %v919 = vsel %vm917, 0, %v918
    %920 = vst [vmem:[#allocation2 + $0x10] sm:$0x11] %v919
    %v921 = vld [vmem:[#allocation2 + $0x28] sm:$0x11]
    %v922 = vsel %vm917, 0, %v921
    %923 = vst [vmem:[#allocation2 + $0x28] sm:$0x11] %v922
    %v924 = vpack.c.bf16 %v896, %v894
    %v925 = vpack.c.bf16 %v897, %v895
    %v928 = vunpack.c.l.b16 %v924
    %v929 = vunpack.c.l.b16 %v925
    %v930 = vunpack.c.h.b16 %v924
    %v931 = vunpack.c.h.b16 %v925
    %v932 = vpack.c.b16 %v929, %v928
    %v933 = vpack.c.b16 %v931, %v930
    %936 = vst [vmem:[#allocation2 + $0x8] sm:$0xff] %v932
    %937 = vst [vmem:[#allocation2 + $0x20] sm:$0xff] %v933
    %v938 = vld [vmem:[#allocation2] sm:$0x88]
    %v939 = vld [vmem:[#allocation2 + $0x8] sm:$0xff]
    %v940 = vld [vmem:[#allocation2 + $0x18] sm:$0x88]
    %v941 = vld [vmem:[#allocation2 + $0x20] sm:$0xff]
    %vm942 = vsmask.f32 4368
    %vm943 = vmor %vm912, %vm942
    %v945 = vshrl.u32 %v938, 16
    %v947 = vrot.slane %v945, 7
    %v948 = vrot.slane %v947, 4
    %v950 = vshrl.u32 %v939, 16
    %v952 = vrot.slane %v950, 7
    %v953 = vshll.u32 %v939, 16
    %v955 = vor.u32 %v952, %v953
    %v956 = vsel %vm943, %v948, %v955
    %v958 = vshrl.u32 %v940, 16
    %v960 = vrot.slane %v958, 7
    %v961 = vrot.slane %v960, 4
    %v963 = vshrl.u32 %v941, 16
    %v965 = vrot.slane %v963, 7
    %v966 = vshll.u32 %v941, 16
    %v968 = vor.u32 %v965, %v966
    %v969 = vsel %vm943, %v961, %v968
    %v970 = vunpack.c.l.b16 %v956
    %v971 = vunpack.c.h.b16 %v956
    %v972 = vunpack.c.l.b16 %v969
    %v973 = vunpack.c.h.b16 %v969
    %v974 = vpack.c.b16 %v972, %v970
    %v975 = vpack.c.b16 %v973, %v971
    %978 = vst [vmem:[#allocation4] sm:$0xff] %v974
    %979 = vst [vmem:[#allocation4 + $0x8] sm:$0xff] %v975
    %v980 = vld [vmem:[#allocation2 + $0x8] sm:$0xff]
    %v981 = vld [vmem:[#allocation2 + $0x20] sm:$0xff]
    %v984 = vunpack.c.l.b16 %v980
    %v985 = vunpack.c.h.b16 %v980
    %v986 = vunpack.c.l.b16 %v981
    %v987 = vunpack.c.h.b16 %v981
    %v988 = vpack.c.b16 %v986, %v984
    %v989 = vpack.c.b16 %v987, %v985
    %992 = vst [vmem:[#allocation4 + $0x10] sm:$0xff] %v988
    %993 = vst [vmem:[#allocation4 + $0x18] sm:$0xff] %v989
    %v994 = vld [vmem:[#allocation2 + $0x8] sm:$0xff]
    %v995 = vld [vmem:[#allocation2 + $0x10] sm:$0x11]
    %v996 = vld [vmem:[#allocation2 + $0x20] sm:$0xff]
    %v997 = vld [vmem:[#allocation2 + $0x28] sm:$0x11]
    %v999 = vshrl.u32 %v994, 16
    %v1001 = vrot.slane %v999, 4
    %v1002 = vshll.u32 %v994, 16
    %v1004 = vrot.slane %v1002, 5
    %v1005 = vor.u32 %v1001, %v1004
    %v1006 = vrot.slane %v1005, 4
    %v1008 = vshll.u32 %v995, 16
    %v1010 = vrot.slane %v1008, 5
    %v1011 = vsel %vm69, %v1006, %v1010
    %v1013 = vshrl.u32 %v996, 16
    %v1015 = vrot.slane %v1013, 4
    %v1016 = vshll.u32 %v996, 16
    %v1018 = vrot.slane %v1016, 5
    %v1019 = vor.u32 %v1015, %v1018
    %v1020 = vrot.slane %v1019, 4
    %v1022 = vshll.u32 %v997, 16
    %v1024 = vrot.slane %v1022, 5
    %v1025 = vsel %vm69, %v1020, %v1024
    %v1026 = vunpack.c.l.b16 %v1011
    %v1027 = vunpack.c.h.b16 %v1011
    %v1028 = vunpack.c.l.b16 %v1025
    %v1029 = vunpack.c.h.b16 %v1025
    %v1030 = vpack.c.b16 %v1028, %v1026
    %v1031 = vpack.c.b16 %v1029, %v1027
    %1034 = vst [vmem:[#allocation4 + $0x20] sm:$0xff] %v1030
    %1035 = vst [vmem:[#allocation4 + $0x28] sm:$0xff] %v1031
    %v1036 = vld [vmem:[#allocation4] sm:$0xff]
    %v1037 = vld [vmem:[#allocation4 + $0x8] sm:$0xff]
    %v1038 = vld [vmem:[#allocation4 + $0x10] sm:$0xff]
    %v1039 = vld [vmem:[#allocation4 + $0x18] sm:$0xff]
    %v1040 = vld [vmem:[#allocation4 + $0x20] sm:$0xff]
    %v1041 = vld [vmem:[#allocation4 + $0x28] sm:$0xff]
    %v1042 = vld [vmem:[#allocation5] sm:$0xf]
    %v1043 = vld [vmem:[#allocation5 + $0x4] sm:$0xf]
    %v1044 = vld [vmem:[#allocation5 + $0x8] sm:$0xf]
    %v1045 = vld [vmem:[#allocation5 + $0xc] sm:$0xf]
    %v1046 = vld [vmem:[#allocation5 + $0x10] sm:$0xf]
    %v1047 = vld [vmem:[#allocation5 + $0x14] sm:$0xf]
    %v1048 = vld [vmem:[#allocation5 + $0x18] sm:$0xf]
    %v1049 = vld [vmem:[#allocation5 + $0x1c] sm:$0xf]
    %v1050 = vld [vmem:[#allocation5 + $0x20] sm:$0xf]
    %v1051 = vld [vmem:[#allocation5 + $0x24] sm:$0xf]
    %v1052 = vld [vmem:[#allocation5 + $0x28] sm:$0xf]
    %v1053 = vld [vmem:[#allocation5 + $0x2c] sm:$0xf]
    %v1054 = vld [vmem:[#allocation5 + $0x30] sm:$0xf]
    %v1055 = vld [vmem:[#allocation5 + $0x34] sm:$0xf]
    %v1056 = vld [vmem:[#allocation5 + $0x38] sm:$0xf]
    %v1057 = vld [vmem:[#allocation5 + $0x3c] sm:$0xf]
    %v1058 = vld [vmem:[#allocation5 + $0x40] sm:$0xf]
    %v1059 = vld [vmem:[#allocation5 + $0x44] sm:$0xf]
    %v1060 = vld [vmem:[#allocation5 + $0x48] sm:$0xf]
    %v1061 = vld [vmem:[#allocation5 + $0x4c] sm:$0xf]
    %v1062 = vld [vmem:[#allocation5 + $0x50] sm:$0xf]
    %v1063 = vld [vmem:[#allocation5 + $0x54] sm:$0xf]
    %v1064 = vld [vmem:[#allocation5 + $0x58] sm:$0xf]
    %v1065 = vld [vmem:[#allocation5 + $0x5c] sm:$0xf]
    %v1066 = vld [vmem:[#allocation5 + $0x60] sm:$0xf]
    %v1067 = vld [vmem:[#allocation5 + $0x64] sm:$0xf]
    %v1068 = vld [vmem:[#allocation5 + $0x68] sm:$0xf]
    %v1069 = vld [vmem:[#allocation5 + $0x6c] sm:$0xf]
    %v1070 = vld [vmem:[#allocation5 + $0x70] sm:$0xf]
    %v1071 = vld [vmem:[#allocation5 + $0x74] sm:$0xf]
    %v1072 = vld [vmem:[#allocation5 + $0x78] sm:$0xf]
    %v1073 = vld [vmem:[#allocation5 + $0x7c] sm:$0xf]
    %v1074 = vld [vmem:[#allocation5 + $0x80] sm:$0xf]
    %v1075 = vld [vmem:[#allocation5 + $0x84] sm:$0xf]
    %v1076 = vld [vmem:[#allocation5 + $0x88] sm:$0xf]
    %v1077 = vld [vmem:[#allocation5 + $0x8c] sm:$0xf]
    %v1078 = vld [vmem:[#allocation5 + $0x90] sm:$0xf]
    %v1079 = vld [vmem:[#allocation5 + $0x94] sm:$0xf]
    %v1080 = vld [vmem:[#allocation5 + $0x98] sm:$0xf]
    %v1081 = vld [vmem:[#allocation5 + $0x9c] sm:$0xf]
    %v1082 = vld [vmem:[#allocation5 + $0xa0] sm:$0xf]
    %v1083 = vld [vmem:[#allocation5 + $0xa4] sm:$0xf]
    %v1084 = vld [vmem:[#allocation5 + $0xa8] sm:$0xf]
    %v1085 = vld [vmem:[#allocation5 + $0xac] sm:$0xf]
    %v1086 = vld [vmem:[#allocation5 + $0xb0] sm:$0xf]
    %v1087 = vld [vmem:[#allocation5 + $0xb4] sm:$0xf]
    %v1088 = vld [vmem:[#allocation5 + $0xb8] sm:$0xf]
    %v1089 = vld [vmem:[#allocation5 + $0xbc] sm:$0xf]
    %v1090 = vld [vmem:[#allocation5 + $0xc0] sm:$0xf]
    %v1091 = vld [vmem:[#allocation5 + $0xc4] sm:$0xf]
    %v1092 = vld [vmem:[#allocation5 + $0xc8] sm:$0xf]
    %v1093 = vld [vmem:[#allocation5 + $0xcc] sm:$0xf]
    %v1094 = vld [vmem:[#allocation5 + $0xd0] sm:$0xf]
    %v1095 = vld [vmem:[#allocation5 + $0xd4] sm:$0xf]
    %v1096 = vld [vmem:[#allocation5 + $0xd8] sm:$0xf]
    %v1097 = vld [vmem:[#allocation5 + $0xdc] sm:$0xf]
    %v1098 = vld [vmem:[#allocation5 + $0xe0] sm:$0xf]
    %v1099 = vld [vmem:[#allocation5 + $0xe4] sm:$0xf]
    %v1100 = vld [vmem:[#allocation5 + $0xe8] sm:$0xf]
    %v1101 = vld [vmem:[#allocation5 + $0xec] sm:$0xf]
    %v1102 = vld [vmem:[#allocation5 + $0xf0] sm:$0xf]
    %v1103 = vld [vmem:[#allocation5 + $0xf4] sm:$0xf]
    %v1104 = vld [vmem:[#allocation5 + $0xf8] sm:$0xf]
    %v1105 = vld [vmem:[#allocation5 + $0xfc] sm:$0xf]
    %v1106 = vld [vmem:[#allocation5 + $0x100] sm:$0xf]
    %v1107 = vld [vmem:[#allocation5 + $0x104] sm:$0xf]
    %v1108 = vld [vmem:[#allocation5 + $0x108] sm:$0xf]
    %v1109 = vld [vmem:[#allocation5 + $0x10c] sm:$0xf]
    %v1110 = vld [vmem:[#allocation5 + $0x110] sm:$0xf]
    %v1111 = vld [vmem:[#allocation5 + $0x114] sm:$0xf]
    %v1112 = vld [vmem:[#allocation5 + $0x118] sm:$0xf]
    %v1113 = vld [vmem:[#allocation5 + $0x11c] sm:$0xf]
    %v1114 = vld [vmem:[#allocation5 + $0x120] sm:$0xf]
    %v1115 = vld [vmem:[#allocation5 + $0x124] sm:$0xf]
    %v1116 = vld [vmem:[#allocation5 + $0x128] sm:$0xf]
    %v1117 = vld [vmem:[#allocation5 + $0x12c] sm:$0xf]
    %v1118 = vld [vmem:[#allocation5 + $0x130] sm:$0xf]
    %v1119 = vld [vmem:[#allocation5 + $0x134] sm:$0xf]
    %v1120 = vld [vmem:[#allocation5 + $0x138] sm:$0xf]
    %v1121 = vld [vmem:[#allocation5 + $0x13c] sm:$0xf]
    %v1122 = vld [vmem:[#allocation5 + $0x140] sm:$0xf]
    %v1123 = vld [vmem:[#allocation5 + $0x144] sm:$0xf]
    %v1124 = vld [vmem:[#allocation5 + $0x148] sm:$0xf]
    %v1125 = vld [vmem:[#allocation5 + $0x14c] sm:$0xf]
    %v1126 = vld [vmem:[#allocation5 + $0x150] sm:$0xf]
    %v1127 = vld [vmem:[#allocation5 + $0x154] sm:$0xf]
    %v1128 = vld [vmem:[#allocation5 + $0x158] sm:$0xf]
    %v1129 = vld [vmem:[#allocation5 + $0x15c] sm:$0xf]
    %v1130 = vld [vmem:[#allocation5 + $0x160] sm:$0xf]
    %v1131 = vld [vmem:[#allocation5 + $0x164] sm:$0xf]
    %v1132 = vld [vmem:[#allocation5 + $0x168] sm:$0xf]
    %v1133 = vld [vmem:[#allocation5 + $0x16c] sm:$0xf]
    %v1134 = vld [vmem:[#allocation5 + $0x170] sm:$0xf]
    %v1135 = vld [vmem:[#allocation5 + $0x174] sm:$0xf]
    %v1136 = vld [vmem:[#allocation5 + $0x178] sm:$0xf]
    %v1137 = vld [vmem:[#allocation5 + $0x17c] sm:$0xf]
    %v1234 = vunpack.c.l.b16 %v1042
    %v1235 = vunpack.c.l.b16 %v1043
    %v1236 = vunpack.c.l.b16 %v1044
    %v1237 = vunpack.c.l.b16 %v1045
    %v1238 = vunpack.c.l.b16 %v1046
    %v1239 = vunpack.c.l.b16 %v1047
    %v1240 = vunpack.c.l.b16 %v1048
    %v1241 = vunpack.c.l.b16 %v1049
    %v1242 = vunpack.c.l.b16 %v1050
    %v1243 = vunpack.c.l.b16 %v1051
    %v1244 = vunpack.c.l.b16 %v1052
    %v1245 = vunpack.c.l.b16 %v1053
    %v1246 = vunpack.c.l.b16 %v1054
    %v1247 = vunpack.c.l.b16 %v1055
    %v1248 = vunpack.c.l.b16 %v1056
    %v1249 = vunpack.c.l.b16 %v1057
    %v1250 = vunpack.c.l.b16 %v1058
    %v1251 = vunpack.c.l.b16 %v1059
    %v1252 = vunpack.c.l.b16 %v1060
    %v1253 = vunpack.c.l.b16 %v1061
    %v1254 = vunpack.c.l.b16 %v1062
    %v1255 = vunpack.c.l.b16 %v1063
    %v1256 = vunpack.c.l.b16 %v1064
    %v1257 = vunpack.c.l.b16 %v1065
    %v1258 = vunpack.c.l.b16 %v1066
    %v1259 = vunpack.c.l.b16 %v1067
    %v1260 = vunpack.c.l.b16 %v1068
    %v1261 = vunpack.c.l.b16 %v1069
    %v1262 = vunpack.c.l.b16 %v1070
    %v1263 = vunpack.c.l.b16 %v1071
    %v1264 = vunpack.c.l.b16 %v1072
    %v1265 = vunpack.c.l.b16 %v1073
    %v1266 = vunpack.c.l.b16 %v1074
    %v1267 = vunpack.c.l.b16 %v1075
    %v1268 = vunpack.c.l.b16 %v1076
    %v1269 = vunpack.c.l.b16 %v1077
    %v1270 = vunpack.c.l.b16 %v1078
    %v1271 = vunpack.c.l.b16 %v1079
    %v1272 = vunpack.c.l.b16 %v1080
    %v1273 = vunpack.c.l.b16 %v1081
    %v1274 = vunpack.c.l.b16 %v1082
    %v1275 = vunpack.c.l.b16 %v1083
    %v1276 = vunpack.c.l.b16 %v1084
    %v1277 = vunpack.c.l.b16 %v1085
    %v1278 = vunpack.c.l.b16 %v1086
    %v1279 = vunpack.c.l.b16 %v1087
    %v1280 = vunpack.c.l.b16 %v1088
    %v1281 = vunpack.c.l.b16 %v1089
    %v1282 = vunpack.c.l.b16 %v1090
    %v1283 = vunpack.c.l.b16 %v1091
    %v1284 = vunpack.c.l.b16 %v1092
    %v1285 = vunpack.c.l.b16 %v1093
    %v1286 = vunpack.c.l.b16 %v1094
    %v1287 = vunpack.c.l.b16 %v1095
    %v1288 = vunpack.c.l.b16 %v1096
    %v1289 = vunpack.c.l.b16 %v1097
    %v1290 = vunpack.c.l.b16 %v1098
    %v1291 = vunpack.c.l.b16 %v1099
    %v1292 = vunpack.c.l.b16 %v1100
    %v1293 = vunpack.c.l.b16 %v1101
    %v1294 = vunpack.c.l.b16 %v1102
    %v1295 = vunpack.c.l.b16 %v1103
    %v1296 = vunpack.c.l.b16 %v1104
    %v1297 = vunpack.c.l.b16 %v1105
    %v1298 = vunpack.c.l.b16 %v1106
    %v1299 = vunpack.c.l.b16 %v1107
    %v1300 = vunpack.c.l.b16 %v1108
    %v1301 = vunpack.c.l.b16 %v1109
    %v1302 = vunpack.c.l.b16 %v1110
    %v1303 = vunpack.c.l.b16 %v1111
    %v1304 = vunpack.c.l.b16 %v1112
    %v1305 = vunpack.c.l.b16 %v1113
    %v1306 = vunpack.c.l.b16 %v1114
    %v1307 = vunpack.c.l.b16 %v1115
    %v1308 = vunpack.c.l.b16 %v1116
    %v1309 = vunpack.c.l.b16 %v1117
    %v1310 = vunpack.c.l.b16 %v1118
    %v1311 = vunpack.c.l.b16 %v1119
    %v1312 = vunpack.c.l.b16 %v1120
    %v1313 = vunpack.c.l.b16 %v1121
    %v1314 = vunpack.c.l.b16 %v1122
    %v1315 = vunpack.c.l.b16 %v1123
    %v1316 = vunpack.c.l.b16 %v1124
    %v1317 = vunpack.c.l.b16 %v1125
    %v1318 = vunpack.c.l.b16 %v1126
    %v1319 = vunpack.c.l.b16 %v1127
    %v1320 = vunpack.c.l.b16 %v1128
    %v1321 = vunpack.c.l.b16 %v1129
    %v1322 = vunpack.c.l.b16 %v1130
    %v1323 = vunpack.c.l.b16 %v1131
    %v1324 = vunpack.c.l.b16 %v1132
    %v1325 = vunpack.c.l.b16 %v1133
    %v1326 = vunpack.c.l.b16 %v1134
    %v1327 = vunpack.c.l.b16 %v1135
    %v1328 = vunpack.c.l.b16 %v1136
    %v1329 = vunpack.c.l.b16 %v1137
    %v1330 = vpack.c.b16 %v1235, %v1234
    %v1331 = vpack.c.b16 %v1237, %v1236
    %v1332 = vpack.c.b16 %v1239, %v1238
    %v1333 = vpack.c.b16 %v1241, %v1240
    %v1334 = vpack.c.b16 %v1243, %v1242
    %v1335 = vpack.c.b16 %v1245, %v1244
    %v1336 = vpack.c.b16 %v1247, %v1246
    %v1337 = vpack.c.b16 %v1249, %v1248
    %v1338 = vpack.c.b16 %v1251, %v1250
    %v1339 = vpack.c.b16 %v1253, %v1252
    %v1340 = vpack.c.b16 %v1255, %v1254
    %v1341 = vpack.c.b16 %v1257, %v1256
    %v1342 = vpack.c.b16 %v1259, %v1258
    %v1343 = vpack.c.b16 %v1261, %v1260
    %v1344 = vpack.c.b16 %v1263, %v1262
    %v1345 = vpack.c.b16 %v1265, %v1264
    %v1346 = vpack.c.b16 %v1267, %v1266
    %v1347 = vpack.c.b16 %v1269, %v1268
    %v1348 = vpack.c.b16 %v1271, %v1270
    %v1349 = vpack.c.b16 %v1273, %v1272
    %v1350 = vpack.c.b16 %v1275, %v1274
    %v1351 = vpack.c.b16 %v1277, %v1276
    %v1352 = vpack.c.b16 %v1279, %v1278
    %v1353 = vpack.c.b16 %v1281, %v1280
    %v1354 = vpack.c.b16 %v1283, %v1282
    %v1355 = vpack.c.b16 %v1285, %v1284
    %v1356 = vpack.c.b16 %v1287, %v1286
    %v1357 = vpack.c.b16 %v1289, %v1288
    %v1358 = vpack.c.b16 %v1291, %v1290
    %v1359 = vpack.c.b16 %v1293, %v1292
    %v1360 = vpack.c.b16 %v1295, %v1294
    %v1361 = vpack.c.b16 %v1297, %v1296
    %v1362 = vpack.c.b16 %v1299, %v1298
    %v1363 = vpack.c.b16 %v1301, %v1300
    %v1364 = vpack.c.b16 %v1303, %v1302
    %v1365 = vpack.c.b16 %v1305, %v1304
    %v1366 = vpack.c.b16 %v1307, %v1306
    %v1367 = vpack.c.b16 %v1309, %v1308
    %v1368 = vpack.c.b16 %v1311, %v1310
    %v1369 = vpack.c.b16 %v1313, %v1312
    %v1370 = vpack.c.b16 %v1315, %v1314
    %v1371 = vpack.c.b16 %v1317, %v1316
    %v1372 = vpack.c.b16 %v1319, %v1318
    %v1373 = vpack.c.b16 %v1321, %v1320
    %v1374 = vpack.c.b16 %v1323, %v1322
    %v1375 = vpack.c.b16 %v1325, %v1324
    %v1376 = vpack.c.b16 %v1327, %v1326
    %v1377 = vpack.c.b16 %v1329, %v1328
    %1426 = vmatprep.subr.bf16.mxu0 0
    %1427 = vmatpush1.bf16.msra.mxu0 %v1330
    %1428 = vmatprep.subr.bf16.mxu0 0
    %1429 = vmatpush1.bf16.msra.mxu0 %v1331
    %1430 = vmatprep.subr.bf16.mxu0 0
    %1431 = vmatpush1.bf16.msra.mxu0 %v1332
    %1432 = vmatprep.subr.bf16.mxu0 0
    %1433 = vmatpush1.bf16.msra.mxu0 %v1333
    %1434 = vmatprep.subr.bf16.mxu0 0
    %1435 = vmatpush1.bf16.msra.mxu0 %v1334
    %1436 = vmatprep.subr.bf16.mxu0 0
    %1437 = vmatpush1.bf16.msra.mxu0 %v1335
    %1438 = vmatprep.subr.bf16.mxu0 0
    %1439 = vmatpush1.bf16.msra.mxu0 %v1336
    %1440 = vmatprep.subr.bf16.mxu0 0
    %1441 = vmatpush1.bf16.msra.mxu0 %v1337
    %1442 = vmatprep.subr.bf16.mxu0 0
    %1443 = vmatpush1.bf16.msra.mxu0 %v1338
    %1444 = vmatprep.subr.bf16.mxu0 0
    %1445 = vmatpush1.bf16.msra.mxu0 %v1339
    %1446 = vmatprep.subr.bf16.mxu0 0
    %1447 = vmatpush1.bf16.msra.mxu0 %v1340
    %1448 = vmatprep.subr.bf16.mxu0 0
    %1449 = vmatpush1.bf16.msra.mxu0 %v1341
    %1450 = vmatprep.subr.bf16.mxu0 0
    %1451 = vmatpush1.bf16.msra.mxu0 %v1342
    %1452 = vmatprep.subr.bf16.mxu0 0
    %1453 = vmatpush1.bf16.msra.mxu0 %v1343
    %1454 = vmatprep.subr.bf16.mxu0 0
    %1455 = vmatpush1.bf16.msra.mxu0 %v1344
    %1456 = vmatprep.subr.bf16.mxu0 0
    %1457 = vmatpush1.bf16.msra.mxu0 %v1345
    %1458 = vmatprep.mubr.bf16.mxu0 %v1037
    %1459 = vmatmul.mubr.bf16.gmra.mrb[0].mxu0 %v1036
    %v1460 = vpop.f32.mrb[0].mxu0
    %v1461 = vadd.f32 0.0, %v1460
    %v1462 = vpop.f32.mrb[0].mxu0
    %v1463 = vpop.f32.mrb[0].mxu0
    %v1464 = vadd.f32 0.0, %v1463
    %v1465 = vpop.f32.mrb[0].mxu0
    %1466 = vdwg.mxu0
    %1467 = vmatprep.subr.bf16.mxu0 0
    %1468 = vmatpush1.bf16.msra.mxu0 %v1346
    %1469 = vmatprep.subr.bf16.mxu0 0
    %1470 = vmatpush1.bf16.msra.mxu0 %v1347
    %1471 = vmatprep.subr.bf16.mxu0 0
    %1472 = vmatpush1.bf16.msra.mxu0 %v1348
    %1473 = vmatprep.subr.bf16.mxu0 0
    %1474 = vmatpush1.bf16.msra.mxu0 %v1349
    %1475 = vmatprep.subr.bf16.mxu0 0
    %1476 = vmatpush1.bf16.msra.mxu0 %v1350
    %1477 = vmatprep.subr.bf16.mxu0 0
    %1478 = vmatpush1.bf16.msra.mxu0 %v1351
    %1479 = vmatprep.subr.bf16.mxu0 0
    %1480 = vmatpush1.bf16.msra.mxu0 %v1352
    %1481 = vmatprep.subr.bf16.mxu0 0
    %1482 = vmatpush1.bf16.msra.mxu0 %v1353
    %1483 = vmatprep.subr.bf16.mxu0 0
    %1484 = vmatpush1.bf16.msra.mxu0 %v1354
    %1485 = vmatprep.subr.bf16.mxu0 0
    %1486 = vmatpush1.bf16.msra.mxu0 %v1355
    %1487 = vmatprep.subr.bf16.mxu0 0
    %1488 = vmatpush1.bf16.msra.mxu0 %v1356
    %1489 = vmatprep.subr.bf16.mxu0 0
    %1490 = vmatpush1.bf16.msra.mxu0 %v1357
    %1491 = vmatprep.subr.bf16.mxu0 0
    %1492 = vmatpush1.bf16.msra.mxu0 %v1358
    %1493 = vmatprep.subr.bf16.mxu0 0
    %1494 = vmatpush1.bf16.msra.mxu0 %v1359
    %1495 = vmatprep.subr.bf16.mxu0 0
    %1496 = vmatpush1.bf16.msra.mxu0 %v1360
    %1497 = vmatprep.subr.bf16.mxu0 0
    %1498 = vmatpush1.bf16.msra.mxu0 %v1361
    %1499 = vmatprep.mubr.bf16.mxu0 %v1039
    %1500 = vmatmul.mubr.bf16.gmra.mrb[0].mxu0 %v1038
    %v1501 = vpop.f32.mrb[0].mxu0
    %v1502 = vadd.f32 %v1461, %v1501
    %v1503 = vpop.f32.mrb[0].mxu0
    %v1504 = vpop.f32.mrb[0].mxu0
    %v1505 = vadd.f32 %v1464, %v1504
    %v1506 = vpop.f32.mrb[0].mxu0
    %1507 = vdwg.mxu0
    %1508 = vmatprep.subr.bf16.mxu0 0
    %1509 = vmatpush1.bf16.msra.mxu0 %v1362
    %1510 = vmatprep.subr.bf16.mxu0 0
    %1511 = vmatpush1.bf16.msra.mxu0 %v1363
    %1512 = vmatprep.subr.bf16.mxu0 0
    %1513 = vmatpush1.bf16.msra.mxu0 %v1364
    %1514 = vmatprep.subr.bf16.mxu0 0
    %1515 = vmatpush1.bf16.msra.mxu0 %v1365
    %1516 = vmatprep.subr.bf16.mxu0 0
    %1517 = vmatpush1.bf16.msra.mxu0 %v1366
    %1518 = vmatprep.subr.bf16.mxu0 0
    %1519 = vmatpush1.bf16.msra.mxu0 %v1367
    %1520 = vmatprep.subr.bf16.mxu0 0
    %1521 = vmatpush1.bf16.msra.mxu0 %v1368
    %1522 = vmatprep.subr.bf16.mxu0 0
    %1523 = vmatpush1.bf16.msra.mxu0 %v1369
    %1524 = vmatprep.subr.bf16.mxu0 0
    %1525 = vmatpush1.bf16.msra.mxu0 %v1370
    %1526 = vmatprep.subr.bf16.mxu0 0
    %1527 = vmatpush1.bf16.msra.mxu0 %v1371
    %1528 = vmatprep.subr.bf16.mxu0 0
    %1529 = vmatpush1.bf16.msra.mxu0 %v1372
    %1530 = vmatprep.subr.bf16.mxu0 0
    %1531 = vmatpush1.bf16.msra.mxu0 %v1373
    %1532 = vmatprep.subr.bf16.mxu0 0
    %1533 = vmatpush1.bf16.msra.mxu0 %v1374
    %1534 = vmatprep.subr.bf16.mxu0 0
    %1535 = vmatpush1.bf16.msra.mxu0 %v1375
    %1536 = vmatprep.subr.bf16.mxu0 0
    %1537 = vmatpush1.bf16.msra.mxu0 %v1376
    %1538 = vmatprep.subr.bf16.mxu0 0
    %1539 = vmatpush1.bf16.msra.mxu0 %v1377
    %1540 = vmatprep.mubr.bf16.mxu0 %v1041
    %1541 = vmatmul.mubr.bf16.gmra.mrb[0].mxu0 %v1040
    %v1542 = vpop.f32.mrb[0].mxu0
    %v1543 = vadd.f32 %v1502, %v1542
    %v1544 = vpop.f32.mrb[0].mxu0
    %v1545 = vpop.f32.mrb[0].mxu0
    %v1546 = vadd.f32 %v1505, %v1545
    %v1547 = vpop.f32.mrb[0].mxu0
    %1548 = vdwg.mxu0
    %v1549 = vld [vmem:[%s7] sm:$0xff]
    %v1550 = vld [vmem:[%s7 + $0x8] sm:$0xff]
    %v1551 = vld [vmem:[%s7 + $0x10] sm:$0xff]
    %v1552 = vld [vmem:[%s7 + $0x18] sm:$0xff]
    %v1553 = vld [vmem:[%s7 + $0x20] sm:$0xff]
    %v1554 = vld [vmem:[%s7 + $0x28] sm:$0xff]
    %v1555 = vld [vmem:[%s7 + $0x30] sm:$0xff]
    %v1556 = vld [vmem:[%s7 + $0x38] sm:$0xff]
    %v1557 = vld [vmem:[%s7 + $0x40] sm:$0xff]
    %v1558 = vld [vmem:[%s7 + $0x48] sm:$0xff]
    %v1559 = vld [vmem:[%s7 + $0x50] sm:$0xff]
    %v1560 = vld [vmem:[%s7 + $0x58] sm:$0xff]
    %v1561 = vld [vmem:[%s7 + $0x60] sm:$0xff]
    %v1562 = vld [vmem:[%s7 + $0x68] sm:$0xff]
    %v1563 = vld [vmem:[%s7 + $0x70] sm:$0xff]
    %v1564 = vld [vmem:[%s7 + $0x78] sm:$0xff]
    %v1565 = vld [vmem:[%s8] sm:$0xf]
    %v1566 = vld [vmem:[%s9] sm:$0x1]
    %v1567 = vld [vmem:[%s10] sm:$0x1]
    %v1568 = vadd.f32 %v1543, %v1546
    %v1569 = vrot.slane %v1568, 4
    %v1570 = vadd.f32 %v1568, %v1569
    %v1571 = vrot.slane %v1570, 2
    %v1572 = vadd.f32 %v1570, %v1571
    %v1573 = vrot.slane %v1572, 1
    %v1574 = vadd.f32 %v1572, %v1573
    %v1575 = vmul.f32 %v1543, %v1543
    %v1576 = vmul.f32 %v1546, %v1546
    %v1577 = vadd.f32 %v1575, %v1576
    %v1578 = vrot.slane %v1577, 4
    %v1579 = vadd.f32 %v1577, %v1578
    %v1580 = vrot.slane %v1579, 2
    %v1581 = vadd.f32 %v1579, %v1580
    %v1582 = vrot.slane %v1581, 1
    %v1583 = vadd.f32 %v1581, %v1582
    %1584 = vmatprep.subr.mxu0 0.0
    %1585 = vmatpush1.msra.mxu0 %v1549
    %1586 = vmatprep.subr.mxu0 0.0
    %1587 = vmatpush1.msra.mxu0 %v1550
    %1588 = vmatprep.subr.mxu0 0.0
    %1589 = vmatpush1.msra.mxu0 %v1551
    %1590 = vmatprep.subr.mxu0 0.0
    %1591 = vmatpush1.msra.mxu0 %v1552
    %1592 = vmatprep.subr.mxu0 0.0
    %1593 = vmatpush1.msra.mxu0 %v1553
    %1594 = vmatprep.subr.mxu0 0.0
    %1595 = vmatpush1.msra.mxu0 %v1554
    %1596 = vmatprep.subr.mxu0 0.0
    %1597 = vmatpush1.msra.mxu0 %v1555
    %1598 = vmatprep.subr.mxu0 0.0
    %1599 = vmatpush1.msra.mxu0 %v1556
    %1600 = vmatprep.subr.mxu0 0.0
    %1601 = vmatpush1.msra.mxu0 %v1557
    %1602 = vmatprep.subr.mxu0 0.0
    %1603 = vmatpush1.msra.mxu0 %v1558
    %1604 = vmatprep.subr.mxu0 0.0
    %1605 = vmatpush1.msra.mxu0 %v1559
    %1606 = vmatprep.subr.mxu0 0.0
    %1607 = vmatpush1.msra.mxu0 %v1560
    %1608 = vmatprep.subr.mxu0 0.0
    %1609 = vmatpush1.msra.mxu0 %v1561
    %1610 = vmatprep.subr.mxu0 0.0
    %1611 = vmatpush1.msra.mxu0 %v1562
    %1612 = vmatprep.subr.mxu0 0.0
    %1613 = vmatpush1.msra.mxu0 %v1563
    %1614 = vmatprep.subr.mxu0 0.0
    %1615 = vmatpush1.msra.mxu0 %v1564
    %1616 = vmatprep.subr.mxu0 0.0
    %1617 = vmatpush1.msra.mxu0 0.0
    %1618 = vmatprep.subr.mxu0 0.0
    %1619 = vmatpush1.msra.mxu0 0.0
    %1620 = vmatprep.subr.mxu0 0.0
    %1621 = vmatpush1.msra.mxu0 0.0
    %1622 = vmatprep.subr.mxu0 0.0
    %1623 = vmatpush1.msra.mxu0 0.0
    %1624 = vmatprep.subr.mxu0 0.0
    %1625 = vmatpush1.msra.mxu0 0.0
    %1626 = vmatprep.subr.mxu0 0.0
    %1627 = vmatpush1.msra.mxu0 0.0
    %1628 = vmatprep.subr.mxu0 0.0
    %1629 = vmatpush1.msra.mxu0 0.0
    %1630 = vmatprep.subr.mxu0 0.0
    %1631 = vmatpush1.msra.mxu0 0.0
    %1632 = vmatprep.subr.mxu0 0.0
    %1633 = vmatpush1.msra.mxu0 0.0
    %1634 = vmatprep.subr.mxu0 0.0
    %1635 = vmatpush1.msra.mxu0 0.0
    %1636 = vmatprep.subr.mxu0 0.0
    %1637 = vmatpush1.msra.mxu0 0.0
    %1638 = vmatprep.subr.mxu0 0.0
    %1639 = vmatpush1.msra.mxu0 0.0
    %1640 = vmatprep.subr.mxu0 0.0
    %1641 = vmatpush1.msra.mxu0 0.0
    %1642 = vmatprep.subr.mxu0 0.0
    %1643 = vmatpush1.msra.mxu0 0.0
    %1644 = vmatprep.subr.mxu0 0.0
    %1645 = vmatpush1.msra.mxu0 0.0
    %1646 = vmatprep.subr.mxu0 0.0
    %1647 = vmatpush1.msra.mxu0 0.0
    %1648 = vmatprep.mubr.f32.mxu0 0.0
    %1649 = vmatmul.mubr.f32.gmra.mrb[0].mxu0 %v1574
    %v1650 = vpop.f32.mrb[0].mxu0
    %v1651 = vadd.f32 0.0, %v1650
    %v1652 = vpop.f32.mrb[0].mxu0
    %1653 = vdwg.mxu0
    %v1654 = vmul.f32 %v1651, 0.001953125
    %1655 = vmatprep.subr.mxu0 0.0
    %1656 = vmatpush1.msra.mxu0 %v1549
    %1657 = vmatprep.subr.mxu0 0.0
    %1658 = vmatpush1.msra.mxu0 %v1550
    %1659 = vmatprep.subr.mxu0 0.0
    %1660 = vmatpush1.msra.mxu0 %v1551
    %1661 = vmatprep.subr.mxu0 0.0
    %1662 = vmatpush1.msra.mxu0 %v1552
    %1663 = vmatprep.subr.mxu0 0.0
    %1664 = vmatpush1.msra.mxu0 %v1553
    %1665 = vmatprep.subr.mxu0 0.0
    %1666 = vmatpush1.msra.mxu0 %v1554
    %1667 = vmatprep.subr.mxu0 0.0
    %1668 = vmatpush1.msra.mxu0 %v1555
    %1669 = vmatprep.subr.mxu0 0.0
    %1670 = vmatpush1.msra.mxu0 %v1556
    %1671 = vmatprep.subr.mxu0 0.0
    %1672 = vmatpush1.msra.mxu0 %v1557
    %1673 = vmatprep.subr.mxu0 0.0
    %1674 = vmatpush1.msra.mxu0 %v1558
    %1675 = vmatprep.subr.mxu0 0.0
    %1676 = vmatpush1.msra.mxu0 %v1559
    %1677 = vmatprep.subr.mxu0 0.0
    %1678 = vmatpush1.msra.mxu0 %v1560
    %1679 = vmatprep.subr.mxu0 0.0
    %1680 = vmatpush1.msra.mxu0 %v1561
    %1681 = vmatprep.subr.mxu0 0.0
    %1682 = vmatpush1.msra.mxu0 %v1562
    %1683 = vmatprep.subr.mxu0 0.0
    %1684 = vmatpush1.msra.mxu0 %v1563
    %1685 = vmatprep.subr.mxu0 0.0
    %1686 = vmatpush1.msra.mxu0 %v1564
    %1687 = vmatprep.subr.mxu0 0.0
    %1688 = vmatpush1.msra.mxu0 0.0
    %1689 = vmatprep.subr.mxu0 0.0
    %1690 = vmatpush1.msra.mxu0 0.0
    %1691 = vmatprep.subr.mxu0 0.0
    %1692 = vmatpush1.msra.mxu0 0.0
    %1693 = vmatprep.subr.mxu0 0.0
    %1694 = vmatpush1.msra.mxu0 0.0
    %1695 = vmatprep.subr.mxu0 0.0
    %1696 = vmatpush1.msra.mxu0 0.0
    %1697 = vmatprep.subr.mxu0 0.0
    %1698 = vmatpush1.msra.mxu0 0.0
    %1699 = vmatprep.subr.mxu0 0.0
    %1700 = vmatpush1.msra.mxu0 0.0
    %1701 = vmatprep.subr.mxu0 0.0
    %1702 = vmatpush1.msra.mxu0 0.0
    %1703 = vmatprep.subr.mxu0 0.0
    %1704 = vmatpush1.msra.mxu0 0.0
    %1705 = vmatprep.subr.mxu0 0.0
    %1706 = vmatpush1.msra.mxu0 0.0
    %1707 = vmatprep.subr.mxu0 0.0
    %1708 = vmatpush1.msra.mxu0 0.0
    %1709 = vmatprep.subr.mxu0 0.0
    %1710 = vmatpush1.msra.mxu0 0.0
    %1711 = vmatprep.subr.mxu0 0.0
    %1712 = vmatpush1.msra.mxu0 0.0
    %1713 = vmatprep.subr.mxu0 0.0
    %1714 = vmatpush1.msra.mxu0 0.0
    %1715 = vmatprep.subr.mxu0 0.0
    %1716 = vmatpush1.msra.mxu0 0.0
    %1717 = vmatprep.subr.mxu0 0.0
    %1718 = vmatpush1.msra.mxu0 0.0
    %1719 = vmatprep.mubr.f32.mxu0 0.0
    %1720 = vmatmul.mubr.f32.gmra.mrb[0].mxu0 %v1583
    %v1721 = vpop.f32.mrb[0].mxu0
    %v1722 = vadd.f32 0.0, %v1721
    %v1723 = vpop.f32.mrb[0].mxu0
    %1724 = vdwg.mxu0
    %v1725 = vmul.f32 %v1722, 0.001953125
    %v1726 = vmul.f32 %v1654, %v1654
    %v1727 = vsub.f32 %v1725, %v1726
    %v1728 = vadd.f32 %v1727, 1e-05
    %v1729 = vrsqrt.pop %v1728
    %v1730 = vmul.f32 %v1566, %v1729
    %v1731 = vmul.f32 %v1654, %v1730
    %v1732 = vsub.f32 %v1567, %v1731
    %vm1733 = vcmask 31744
    %v1735 = vsel %vm1733, %v1730, 0
    %vm1737 = vcmask 1043456
    %v1739 = vsel %vm1737, %v1565, 0
    %1741 = vmatprep.subr.mxu0 0.0
    %1742 = vmatpush1.msra.mxu0 %v1739
    %1743 = vmatprep.subr.mxu0 0.0
    %1744 = vmatpush1.msra.mxu0 0.0
    %1745 = vmatprep.subr.mxu0 0.0
    %1746 = vmatpush1.msra.mxu0 0.0
    %1747 = vmatprep.subr.mxu0 0.0
    %1748 = vmatpush1.msra.mxu0 0.0
    %1749 = vmatprep.subr.mxu0 0.0
    %1750 = vmatpush1.msra.mxu0 0.0
    %1751 = vmatprep.subr.mxu0 0.0
    %1752 = vmatpush1.msra.mxu0 0.0
    %1753 = vmatprep.subr.mxu0 0.0
    %1754 = vmatpush1.msra.mxu0 0.0
    %1755 = vmatprep.subr.mxu0 0.0
    %1756 = vmatpush1.msra.mxu0 0.0
    %1757 = vmatprep.subr.mxu0 0.0
    %1758 = vmatpush1.msra.mxu0 0.0
    %1759 = vmatprep.subr.mxu0 0.0
    %1760 = vmatpush1.msra.mxu0 0.0
    %1761 = vmatprep.subr.mxu0 0.0
    %1762 = vmatpush1.msra.mxu0 0.0
    %1763 = vmatprep.subr.mxu0 0.0
    %1764 = vmatpush1.msra.mxu0 0.0
    %1765 = vmatprep.subr.mxu0 0.0
    %1766 = vmatpush1.msra.mxu0 0.0
    %1767 = vmatprep.subr.mxu0 0.0
    %1768 = vmatpush1.msra.mxu0 0.0
    %1769 = vmatprep.subr.mxu0 0.0
    %1770 = vmatpush1.msra.mxu0 0.0
    %1771 = vmatprep.subr.mxu0 0.0
    %1772 = vmatpush1.msra.mxu0 0.0
    %1773 = vmatprep.subr.mxu0 0.0
    %1774 = vmatpush1.msra.mxu0 0.0
    %1775 = vmatprep.subr.mxu0 0.0
    %1776 = vmatpush1.msra.mxu0 0.0
    %1777 = vmatprep.subr.mxu0 0.0
    %1778 = vmatpush1.msra.mxu0 0.0
    %1779 = vmatprep.subr.mxu0 0.0
    %1780 = vmatpush1.msra.mxu0 0.0
    %1781 = vmatprep.subr.mxu0 0.0
    %1782 = vmatpush1.msra.mxu0 0.0
    %1783 = vmatprep.subr.mxu0 0.0
    %1784 = vmatpush1.msra.mxu0 0.0
    %1785 = vmatprep.subr.mxu0 0.0
    %1786 = vmatpush1.msra.mxu0 0.0
    %1787 = vmatprep.subr.mxu0 0.0
    %1788 = vmatpush1.msra.mxu0 0.0
    %1789 = vmatprep.subr.mxu0 0.0
    %1790 = vmatpush1.msra.mxu0 0.0
    %1791 = vmatprep.subr.mxu0 0.0
    %1792 = vmatpush1.msra.mxu0 0.0
    %1793 = vmatprep.subr.mxu0 0.0
    %1794 = vmatpush1.msra.mxu0 0.0
    %1795 = vmatprep.subr.mxu0 0.0
    %1796 = vmatpush1.msra.mxu0 0.0
    %1797 = vmatprep.subr.mxu0 0.0
    %1798 = vmatpush1.msra.mxu0 0.0
    %1799 = vmatprep.subr.mxu0 0.0
    %1800 = vmatpush1.msra.mxu0 0.0
    %1801 = vmatprep.subr.mxu0 0.0
    %1802 = vmatpush1.msra.mxu0 0.0
    %1803 = vmatprep.subr.mxu0 0.0
    %1804 = vmatpush1.msra.mxu0 0.0
    %1805 = vmatprep.mubr.f32.mxu0 0.0
    %1806 = vmatmul.mubr.f32.gmra.mrb[0].mxu0 %v1735
    %v1807 = vpop.f32.mrb[0].mxu0
    %v1808 = vadd.f32 0.0, %v1807
    %v1809 = vpop.f32.mrb[0].mxu0
    %1810 = vdwg.mxu0
    %v1812 = vsel %vm1733, %v1732, 0
    %1814 = vmatprep.subr.mxu0 0.0
    %1815 = vmatpush1.msra.mxu0 %v1739
    %1816 = vmatprep.subr.mxu0 0.0
    %1817 = vmatpush1.msra.mxu0 0.0
    %1818 = vmatprep.subr.mxu0 0.0
    %1819 = vmatpush1.msra.mxu0 0.0
    %1820 = vmatprep.subr.mxu0 0.0
    %1821 = vmatpush1.msra.mxu0 0.0
    %1822 = vmatprep.subr.mxu0 0.0
    %1823 = vmatpush1.msra.mxu0 0.0
    %1824 = vmatprep.subr.mxu0 0.0
    %1825 = vmatpush1.msra.mxu0 0.0
    %1826 = vmatprep.subr.mxu0 0.0
    %1827 = vmatpush1.msra.mxu0 0.0
    %1828 = vmatprep.subr.mxu0 0.0
    %1829 = vmatpush1.msra.mxu0 0.0
    %1830 = vmatprep.subr.mxu0 0.0
    %1831 = vmatpush1.msra.mxu0 0.0
    %1832 = vmatprep.subr.mxu0 0.0
    %1833 = vmatpush1.msra.mxu0 0.0
    %1834 = vmatprep.subr.mxu0 0.0
    %1835 = vmatpush1.msra.mxu0 0.0
    %1836 = vmatprep.subr.mxu0 0.0
    %1837 = vmatpush1.msra.mxu0 0.0
    %1838 = vmatprep.subr.mxu0 0.0
    %1839 = vmatpush1.msra.mxu0 0.0
    %1840 = vmatprep.subr.mxu0 0.0
    %1841 = vmatpush1.msra.mxu0 0.0
    %1842 = vmatprep.subr.mxu0 0.0
    %1843 = vmatpush1.msra.mxu0 0.0
    %1844 = vmatprep.subr.mxu0 0.0
    %1845 = vmatpush1.msra.mxu0 0.0
    %1846 = vmatprep.subr.mxu0 0.0
    %1847 = vmatpush1.msra.mxu0 0.0
    %1848 = vmatprep.subr.mxu0 0.0
    %1849 = vmatpush1.msra.mxu0 0.0
    %1850 = vmatprep.subr.mxu0 0.0
    %1851 = vmatpush1.msra.mxu0 0.0
    %1852 = vmatprep.subr.mxu0 0.0
    %1853 = vmatpush1.msra.mxu0 0.0
    %1854 = vmatprep.subr.mxu0 0.0
    %1855 = vmatpush1.msra.mxu0 0.0
    %1856 = vmatprep.subr.mxu0 0.0
    %1857 = vmatpush1.msra.mxu0 0.0
    %1858 = vmatprep.subr.mxu0 0.0
    %1859 = vmatpush1.msra.mxu0 0.0
    %1860 = vmatprep.subr.mxu0 0.0
    %1861 = vmatpush1.msra.mxu0 0.0
    %1862 = vmatprep.subr.mxu0 0.0
    %1863 = vmatpush1.msra.mxu0 0.0
    %1864 = vmatprep.subr.mxu0 0.0
    %1865 = vmatpush1.msra.mxu0 0.0
    %1866 = vmatprep.subr.mxu0 0.0
    %1867 = vmatpush1.msra.mxu0 0.0
    %1868 = vmatprep.subr.mxu0 0.0
    %1869 = vmatpush1.msra.mxu0 0.0
    %1870 = vmatprep.subr.mxu0 0.0
    %1871 = vmatpush1.msra.mxu0 0.0
    %1872 = vmatprep.subr.mxu0 0.0
    %1873 = vmatpush1.msra.mxu0 0.0
    %1874 = vmatprep.subr.mxu0 0.0
    %1875 = vmatpush1.msra.mxu0 0.0
    %1876 = vmatprep.subr.mxu0 0.0
    %1877 = vmatpush1.msra.mxu0 0.0
    %1878 = vmatprep.mubr.f32.mxu0 0.0
    %1879 = vmatmul.mubr.f32.gmra.mrb[0].mxu0 %v1812
    %v1880 = vpop.f32.mrb[0].mxu0
    %v1881 = vadd.f32 0.0, %v1880
    %v1882 = vpop.f32.mrb[0].mxu0
    %1883 = vdwg.mxu0
    %v1884 = vlaneseq
    %v1885 = vshrl.u32 %v1884, 7
    %v1886 = vsub.s32 0, %v1885
    %v1887 = vrot.slane %v1808, %v1886
    %v1888 = vmul.f32 %v1543, %v1887
    %v1889 = vmul.f32 %v1546, %v1887
    %v1890 = vlaneseq
    %v1891 = vshrl.u32 %v1890, 7
    %v1892 = vsub.s32 0, %v1891
    %v1893 = vrot.slane %v1881, %v1892
    %v1894 = vadd.f32 %v1888, %v1893
    %v1895 = vadd.f32 %v1889, %v1893
    %v1896 = vld [vmem:[%s0] sm:$0xf]
    %v1897 = vld [vmem:[%s0 + $0x4] sm:$0x1]
    %v1898 = vld [vmem:[%s0 + $0x8] sm:$0xf]
    %v1899 = vld [vmem:[%s0 + $0xc] sm:$0x1]
    %v1901 = vshrl.u32 %v1896, 16
    %v1903 = vrot.slane %v1901, 4
    %v1904 = vshll.u32 %v1896, 16
    %v1906 = vrot.slane %v1904, 5
    %v1907 = vor.u32 %v1903, %v1906
    %v1908 = vrot.slane %v1907, 4
    %v1910 = vshll.u32 %v1897, 16
    %v1912 = vrot.slane %v1910, 5
    %v1913 = vsel %vm69, %v1908, %v1912
    %v1915 = vshrl.u32 %v1898, 16
    %v1917 = vrot.slane %v1915, 4
    %v1918 = vshll.u32 %v1898, 16
    %v1920 = vrot.slane %v1918, 5
    %v1921 = vor.u32 %v1917, %v1920
    %v1922 = vrot.slane %v1921, 4
    %v1924 = vshll.u32 %v1899, 16
    %v1926 = vrot.slane %v1924, 5
    %v1927 = vsel %vm69, %v1922, %v1926
    %v1930 = vunpack.c.l.bf16 %v1913
    %v1931 = vunpack.c.l.bf16 %v1927
    %v1932 = vadd.f32 %v1930, %v1894
    %v1933 = vadd.f32 %v1931, %v1895
    %1934 = vst [vmem:[#allocation8] sm:$0xff] %v1932
    %1935 = vst [vmem:[#allocation8 + $0x8] sm:$0xff] %v1933
    // Predicated region
    $region50: #{tpu_custom_call.1} parent=1 // pred_check
      _
    $region51: #{tpu_custom_call.1} parent=1 // pred_check_branch
      %1937 = sbr.rel (0) target = $region53
    $region52: #{tpu_custom_call.1} parent=1 // pred_region
      %s1939 = ssub.s32 256, 256
      %1940 = vsyncadd [#allocation7], %s1939
      %s1941 = sshll.u32 [#allocation8], 4
      %s1942 = int_to_ptr.vmem [resolvable:$true] %s1941
      %1947 = dma.vmem_to_hbm [thread:$0]  %s1942, 256, %s11, [#allocation7], 128, 128, 8
    $region53: #{tpu_custom_call.1} parent=1 // pred_fallthru
      _
    // Predicated region
    $region54: #{tpu_custom_call.1} parent=1 // pred_check
      _
    $region55: #{tpu_custom_call.1} parent=1 // pred_check_branch
      %1949 = sbr.rel (0) target = $region57
    $region56: #{tpu_custom_call.1} parent=1 // pred_region
      %1950 = dma.done [#allocation7], 256
    $region57: #{tpu_custom_call.1} parent=1 // pred_fallthru
      _
    %1951 = vsyncpa [#allocation6], 1
    %1952 = vsyncpa [#allocation7], 1

</llo_original>
